<compile_context>
chip_gen: v6e
topology: v6e:2x2x1
jax: 0.10.0
libtpu: 0.0.40
codegen_flags: <defaults>
</compile_context>

<pallas_src>
import jax
import jax.numpy as jnp
import numpy as np
from jax import lax
from jax.experimental import pallas as pl
from jax.experimental.pallas import tpu as pltpu

HIDDEN = 64          # fc1 output / fc2 input width
LANES = 128          # TPU lane width (batch laid out lane-dense)
CHUNK_ROWS = 32      # rows per inner-loop step (= 4 f32 vregs)
MAX_TILE_ROWS = 2048 # 2048*128*4B = 1 MiB per x tile


def _round_up(n, m):
    return ((n + m - 1) // m) * m


def _make_mlp_kernel(n_pos):
    """Build the kernel for a static sign-partition point `n_pos`:
    units [0, n_pos) have w2 >= 0 (ReLU folds to max), units [n_pos, 64) have
    w2 < 0 (ReLU folds to min)."""

    def kernel(x_ref, a_ref, c_ref, b2_ref, o_ref):
        # x_ref / o_ref : (tile_rows, 128) f32 VMEM tiles (lane-dense batch).
        # a_ref / c_ref : (64,) f32 SMEM  (w1*w2 and b1*w2, sign-partitioned).
        # b2_ref        : (1,)  f32 SMEM  (fc2 bias).
        n_chunks = x_ref.shape[0] // CHUNK_ROWS

        # Hoist all scalar reads and broadcasts out of the chunk loop: they are
        # invariant across chunks and across grid steps.
        a = [a_ref[j] for j in range(HIDDEN)]
        c = [c_ref[j] for j in range(HIDDEN)]
        b2_vec = jnp.full((CHUNK_ROWS, LANES), b2_ref[0], dtype=jnp.float32)
        zero_vec = jnp.zeros((CHUNK_ROWS, LANES), dtype=jnp.float32)

        def chunk_body(ci, carry):
            r0 = pl.multiple_of(ci * CHUNK_ROWS, CHUNK_ROWS)
            xc = x_ref[pl.ds(r0, CHUNK_ROWS), :]               # (32, 128) f32
            # Two interleaved accumulators halve the serial add chain per vreg.
            acc = [b2_vec, zero_vec]
            k = 0
            for j in range(n_pos):                             # w2 >= 0 units
                acc[k & 1] = acc[k & 1] + jnp.maximum(xc * a[j] + c[j], 0.0)
                k += 1
            for j in range(n_pos, HIDDEN):                     # w2 < 0 units
                acc[k & 1] = acc[k & 1] + jnp.minimum(xc * a[j] + c[j], 0.0)
                k += 1
            o_ref[pl.ds(r0, CHUNK_ROWS), :] = (acc[0] + acc[1]).astype(o_ref.dtype)
            return carry

        lax.fori_loop(0, n_chunks, chunk_body, 0)

    return kernel


def quadratic_model_forward(x, w1, b1, w2, b2):
    """Forward pass matching QuadraticModel.

    x : (N, 1) f32
    w1: (64, 1) fc1.weight, b1: (64,) fc1.bias
    w2: (1, 64) fc2.weight, b2: (1,)  fc2.bias
    returns (N, 1) f32
    """
    N = x.shape[0]

    # --- fold fc2 into fc1 and partition hidden units by sign(w2) (host-side) ---
    w1f = np.asarray(jax.device_get(w1), dtype=np.float32).reshape(HIDDEN)
    b1f = np.asarray(jax.device_get(b1), dtype=np.float32).reshape(HIDDEN)
    w2f = np.asarray(jax.device_get(w2), dtype=np.float32).reshape(HIDDEN)
    b2f = np.asarray(jax.device_get(b2), dtype=np.float32).reshape(1)

    neg = w2f < 0.0
    order = np.argsort(neg, kind="stable")            # w2 >= 0 units first
    n_pos = int(np.count_nonzero(~neg))
    a_sorted = jnp.asarray((w1f * w2f)[order])        # (64,) x-coefficients
    c_sorted = jnp.asarray((b1f * w2f)[order])        # (64,) constants
    b2_arr = jnp.asarray(b2f)

    # --- lane-dense layout + tile sizing (>= 2 even grid steps when possible) ---
    rows_needed = max(1, -(-N // LANES))
    if rows_needed >= 2 * CHUNK_ROWS:
        n_tiles = max(2, -(-rows_needed // MAX_TILE_ROWS))
        n_tiles += n_tiles % 2                        # even step count for 2-TC v7x
        tile_rows = min(MAX_TILE_ROWS,
                        _round_up(-(-rows_needed // n_tiles), CHUNK_ROWS))
    else:
        tile_rows = _round_up(rows_needed, CHUNK_ROWS)
    rows_total = _round_up(rows_needed, tile_rows)
    n_pad = rows_total * LANES

    x_flat = x.reshape(-1).astype(jnp.float32)
    if n_pad != N:                                    # skip the extra HBM pass when aligned
        x_flat = jnp.pad(x_flat, (0, n_pad - N))
    x2d = x_flat.reshape(rows_total, LANES)

    grid = (rows_total // tile_rows,)
    lane_spec = pl.BlockSpec((tile_rows, LANES), lambda i: (i, 0))
    smem_spec = pl.BlockSpec(memory_space=pltpu.MemorySpace.SMEM)

    out2d = pl.pallas_call(
        _make_mlp_kernel(n_pos),
        out_shape=jax.ShapeDtypeStruct((rows_total, LANES), jnp.float32),
        grid_spec=pltpu.PrefetchScalarGridSpec(
            num_scalar_prefetch=0,
            grid=grid,
            in_specs=[lane_spec, smem_spec, smem_spec, smem_spec],
            out_specs=lane_spec,
        ),
        compiler_params=pltpu.CompilerParams(
            dimension_semantics=("parallel",),        # megacore sharding on v7x
        ),
    )(x2d, a_sorted, c_sorted, b2_arr)

    out_flat = out2d.reshape(n_pad)
    if n_pad != N:
        out_flat = out_flat[:N]
    return out_flat.reshape(N, 1)


def init_params(key):
    """Deterministic init mirroring nn.Linear shapes (Kaiming-uniform-ish bounds)."""
    k1, k2, k3, k4 = jax.random.split(key, 4)
    bound1 = 1.0                                   # fc1: fan_in = 1
    w1 = jax.random.uniform(k1, (HIDDEN, 1), jnp.float32, -bound1, bound1)  # fc1.weight
    b1 = jax.random.uniform(k2, (HIDDEN,), jnp.float32, -bound1, bound1)    # fc1.bias
    bound2 = 1.0 / float(np.sqrt(HIDDEN))          # fc2: fan_in = 64
    w2 = jax.random.uniform(k3, (1, HIDDEN), jnp.float32, -bound2, bound2)  # fc2.weight
    b2 = jax.random.uniform(k4, (1,), jnp.float32, -bound2, bound2)         # fc2.bias
    return w1, b1, w2, b2


def reference_forward(x, w1, b1, w2, b2):
    # Pure elementwise/sum f32 reference (no TPU matmul precision quirks).
    h = jnp.maximum(x * w1.reshape(1, -1) + b1.reshape(1, -1), 0.0)   # (N, 64)
    return jnp.sum(h * w2.reshape(1, -1), axis=1, keepdims=True) + b2.reshape(1, 1)


if __name__ == "__main__":
    key = jax.random.PRNGKey(0)
    kx, kp = jax.random.split(key)
    w1, b1, w2, b2 = init_params(kp)

    # Small primary case (module implies (N,1) inputs), a ragged/padded case, and a
    # tile-aligned multi-grid-step case (exercises the >=2-step "parallel" grid).
    for n in (8, 4100, 16384):
        x = jax.random.normal(jax.random.fold_in(kx, n), (n, 1), dtype=jnp.float32)
        out = jax.block_until_ready(quadratic_model_forward(x, w1, b1, w2, b2))
        ref = reference_forward(x, w1, b1, w2, b2)
        assert out.shape == (n, 1), out.shape
        assert jnp.allclose(out, ref, atol=1e-4, rtol=1e-4), f"mismatch vs reference at n={n}"

    print("KERNEL_OK")
</pallas_src>

<mosaic_0001>
module attributes {stable_mosaic.version = 11 : i64} {
  func.func @kernel(%arg0: i32, %arg1: memref<32x128xf32, #tpu.memory_space<vmem>>, %arg2: memref<64xf32, #tpu.memory_space<smem>>, %arg3: memref<64xf32, #tpu.memory_space<smem>>, %arg4: memref<1xf32, #tpu.memory_space<smem>>, %arg5: memref<32x128xf32, #tpu.memory_space<vmem>>) attributes {dimension_semantics = [#tpu.dimension_semantics<parallel>], iteration_bounds = array<i64: 1>, scalar_prefetch = 0 : i64, scratch_operands = 0 : i64, tpu.core_type = #tpu.core_type<tc>, window_params = [{transform_indices = @transform_0, window_bounds = array<i64: 32, 128>}, {transform_indices = @transform_1, window_bounds = array<i64: 64>}, {transform_indices = @transform_2, window_bounds = array<i64: 64>}, {transform_indices = @transform_3, window_bounds = array<i64: 1>}, {transform_indices = @transform_4, window_bounds = array<i64: 32, 128>}]} {
    %c0 = arith.constant 0 : index
    %0 = memref.load %arg2[%c0] : memref<64xf32, #tpu.memory_space<smem>>
    %c1 = arith.constant 1 : index
    %1 = memref.load %arg2[%c1] : memref<64xf32, #tpu.memory_space<smem>>
    %c2 = arith.constant 2 : index
    %2 = memref.load %arg2[%c2] : memref<64xf32, #tpu.memory_space<smem>>
    %c3 = arith.constant 3 : index
    %3 = memref.load %arg2[%c3] : memref<64xf32, #tpu.memory_space<smem>>
    %c4 = arith.constant 4 : index
    %4 = memref.load %arg2[%c4] : memref<64xf32, #tpu.memory_space<smem>>
    %c5 = arith.constant 5 : index
    %5 = memref.load %arg2[%c5] : memref<64xf32, #tpu.memory_space<smem>>
    %c6 = arith.constant 6 : index
    %6 = memref.load %arg2[%c6] : memref<64xf32, #tpu.memory_space<smem>>
    %c7 = arith.constant 7 : index
    %7 = memref.load %arg2[%c7] : memref<64xf32, #tpu.memory_space<smem>>
    %c8 = arith.constant 8 : index
    %8 = memref.load %arg2[%c8] : memref<64xf32, #tpu.memory_space<smem>>
    %c9 = arith.constant 9 : index
    %9 = memref.load %arg2[%c9] : memref<64xf32, #tpu.memory_space<smem>>
    %c10 = arith.constant 10 : index
    %10 = memref.load %arg2[%c10] : memref<64xf32, #tpu.memory_space<smem>>
    %c11 = arith.constant 11 : index
    %11 = memref.load %arg2[%c11] : memref<64xf32, #tpu.memory_space<smem>>
    %c12 = arith.constant 12 : index
    %12 = memref.load %arg2[%c12] : memref<64xf32, #tpu.memory_space<smem>>
    %c13 = arith.constant 13 : index
    %13 = memref.load %arg2[%c13] : memref<64xf32, #tpu.memory_space<smem>>
    %c14 = arith.constant 14 : index
    %14 = memref.load %arg2[%c14] : memref<64xf32, #tpu.memory_space<smem>>
    %c15 = arith.constant 15 : index
    %15 = memref.load %arg2[%c15] : memref<64xf32, #tpu.memory_space<smem>>
    %c16 = arith.constant 16 : index
    %16 = memref.load %arg2[%c16] : memref<64xf32, #tpu.memory_space<smem>>
    %c17 = arith.constant 17 : index
    %17 = memref.load %arg2[%c17] : memref<64xf32, #tpu.memory_space<smem>>
    %c18 = arith.constant 18 : index
    %18 = memref.load %arg2[%c18] : memref<64xf32, #tpu.memory_space<smem>>
    %c19 = arith.constant 19 : index
    %19 = memref.load %arg2[%c19] : memref<64xf32, #tpu.memory_space<smem>>
    %c20 = arith.constant 20 : index
    %20 = memref.load %arg2[%c20] : memref<64xf32, #tpu.memory_space<smem>>
    %c21 = arith.constant 21 : index
    %21 = memref.load %arg2[%c21] : memref<64xf32, #tpu.memory_space<smem>>
    %c22 = arith.constant 22 : index
    %22 = memref.load %arg2[%c22] : memref<64xf32, #tpu.memory_space<smem>>
    %c23 = arith.constant 23 : index
    %23 = memref.load %arg2[%c23] : memref<64xf32, #tpu.memory_space<smem>>
    %c24 = arith.constant 24 : index
    %24 = memref.load %arg2[%c24] : memref<64xf32, #tpu.memory_space<smem>>
    %c25 = arith.constant 25 : index
    %25 = memref.load %arg2[%c25] : memref<64xf32, #tpu.memory_space<smem>>
    %c26 = arith.constant 26 : index
    %26 = memref.load %arg2[%c26] : memref<64xf32, #tpu.memory_space<smem>>
    %c27 = arith.constant 27 : index
    %27 = memref.load %arg2[%c27] : memref<64xf32, #tpu.memory_space<smem>>
    %c28 = arith.constant 28 : index
    %28 = memref.load %arg2[%c28] : memref<64xf32, #tpu.memory_space<smem>>
    %c29 = arith.constant 29 : index
    %29 = memref.load %arg2[%c29] : memref<64xf32, #tpu.memory_space<smem>>
    %c30 = arith.constant 30 : index
    %30 = memref.load %arg2[%c30] : memref<64xf32, #tpu.memory_space<smem>>
    %c31 = arith.constant 31 : index
    %31 = memref.load %arg2[%c31] : memref<64xf32, #tpu.memory_space<smem>>
    %c32 = arith.constant 32 : index
    %32 = memref.load %arg2[%c32] : memref<64xf32, #tpu.memory_space<smem>>
    %c33 = arith.constant 33 : index
    %33 = memref.load %arg2[%c33] : memref<64xf32, #tpu.memory_space<smem>>
    %c34 = arith.constant 34 : index
    %34 = memref.load %arg2[%c34] : memref<64xf32, #tpu.memory_space<smem>>
    %c35 = arith.constant 35 : index
    %35 = memref.load %arg2[%c35] : memref<64xf32, #tpu.memory_space<smem>>
    %c36 = arith.constant 36 : index
    %36 = memref.load %arg2[%c36] : memref<64xf32, #tpu.memory_space<smem>>
    %c37 = arith.constant 37 : index
    %37 = memref.load %arg2[%c37] : memref<64xf32, #tpu.memory_space<smem>>
    %c38 = arith.constant 38 : index
    %38 = memref.load %arg2[%c38] : memref<64xf32, #tpu.memory_space<smem>>
    %c39 = arith.constant 39 : index
    %39 = memref.load %arg2[%c39] : memref<64xf32, #tpu.memory_space<smem>>
    %c40 = arith.constant 40 : index
    %40 = memref.load %arg2[%c40] : memref<64xf32, #tpu.memory_space<smem>>
    %c41 = arith.constant 41 : index
    %41 = memref.load %arg2[%c41] : memref<64xf32, #tpu.memory_space<smem>>
    %c42 = arith.constant 42 : index
    %42 = memref.load %arg2[%c42] : memref<64xf32, #tpu.memory_space<smem>>
    %c43 = arith.constant 43 : index
    %43 = memref.load %arg2[%c43] : memref<64xf32, #tpu.memory_space<smem>>
    %c44 = arith.constant 44 : index
    %44 = memref.load %arg2[%c44] : memref<64xf32, #tpu.memory_space<smem>>
    %c45 = arith.constant 45 : index
    %45 = memref.load %arg2[%c45] : memref<64xf32, #tpu.memory_space<smem>>
    %c46 = arith.constant 46 : index
    %46 = memref.load %arg2[%c46] : memref<64xf32, #tpu.memory_space<smem>>
    %c47 = arith.constant 47 : index
    %47 = memref.load %arg2[%c47] : memref<64xf32, #tpu.memory_space<smem>>
    %c48 = arith.constant 48 : index
    %48 = memref.load %arg2[%c48] : memref<64xf32, #tpu.memory_space<smem>>
    %c49 = arith.constant 49 : index
    %49 = memref.load %arg2[%c49] : memref<64xf32, #tpu.memory_space<smem>>
    %c50 = arith.constant 50 : index
    %50 = memref.load %arg2[%c50] : memref<64xf32, #tpu.memory_space<smem>>
    %c51 = arith.constant 51 : index
    %51 = memref.load %arg2[%c51] : memref<64xf32, #tpu.memory_space<smem>>
    %c52 = arith.constant 52 : index
    %52 = memref.load %arg2[%c52] : memref<64xf32, #tpu.memory_space<smem>>
    %c53 = arith.constant 53 : index
    %53 = memref.load %arg2[%c53] : memref<64xf32, #tpu.memory_space<smem>>
    %c54 = arith.constant 54 : index
    %54 = memref.load %arg2[%c54] : memref<64xf32, #tpu.memory_space<smem>>
    %c55 = arith.constant 55 : index
    %55 = memref.load %arg2[%c55] : memref<64xf32, #tpu.memory_space<smem>>
    %c56 = arith.constant 56 : index
    %56 = memref.load %arg2[%c56] : memref<64xf32, #tpu.memory_space<smem>>
    %c57 = arith.constant 57 : index
    %57 = memref.load %arg2[%c57] : memref<64xf32, #tpu.memory_space<smem>>
    %c58 = arith.constant 58 : index
    %58 = memref.load %arg2[%c58] : memref<64xf32, #tpu.memory_space<smem>>
    %c59 = arith.constant 59 : index
    %59 = memref.load %arg2[%c59] : memref<64xf32, #tpu.memory_space<smem>>
    %c60 = arith.constant 60 : index
    %60 = memref.load %arg2[%c60] : memref<64xf32, #tpu.memory_space<smem>>
    %c61 = arith.constant 61 : index
    %61 = memref.load %arg2[%c61] : memref<64xf32, #tpu.memory_space<smem>>
    %c62 = arith.constant 62 : index
    %62 = memref.load %arg2[%c62] : memref<64xf32, #tpu.memory_space<smem>>
    %c63 = arith.constant 63 : index
    %63 = memref.load %arg2[%c63] : memref<64xf32, #tpu.memory_space<smem>>
    %c0_0 = arith.constant 0 : index
    %64 = memref.load %arg3[%c0_0] : memref<64xf32, #tpu.memory_space<smem>>
    %c1_1 = arith.constant 1 : index
    %65 = memref.load %arg3[%c1_1] : memref<64xf32, #tpu.memory_space<smem>>
    %c2_2 = arith.constant 2 : index
    %66 = memref.load %arg3[%c2_2] : memref<64xf32, #tpu.memory_space<smem>>
    %c3_3 = arith.constant 3 : index
    %67 = memref.load %arg3[%c3_3] : memref<64xf32, #tpu.memory_space<smem>>
    %c4_4 = arith.constant 4 : index
    %68 = memref.load %arg3[%c4_4] : memref<64xf32, #tpu.memory_space<smem>>
    %c5_5 = arith.constant 5 : index
    %69 = memref.load %arg3[%c5_5] : memref<64xf32, #tpu.memory_space<smem>>
    %c6_6 = arith.constant 6 : index
    %70 = memref.load %arg3[%c6_6] : memref<64xf32, #tpu.memory_space<smem>>
    %c7_7 = arith.constant 7 : index
    %71 = memref.load %arg3[%c7_7] : memref<64xf32, #tpu.memory_space<smem>>
    %c8_8 = arith.constant 8 : index
    %72 = memref.load %arg3[%c8_8] : memref<64xf32, #tpu.memory_space<smem>>
    %c9_9 = arith.constant 9 : index
    %73 = memref.load %arg3[%c9_9] : memref<64xf32, #tpu.memory_space<smem>>
    %c10_10 = arith.constant 10 : index
    %74 = memref.load %arg3[%c10_10] : memref<64xf32, #tpu.memory_space<smem>>
    %c11_11 = arith.constant 11 : index
    %75 = memref.load %arg3[%c11_11] : memref<64xf32, #tpu.memory_space<smem>>
    %c12_12 = arith.constant 12 : index
    %76 = memref.load %arg3[%c12_12] : memref<64xf32, #tpu.memory_space<smem>>
    %c13_13 = arith.constant 13 : index
    %77 = memref.load %arg3[%c13_13] : memref<64xf32, #tpu.memory_space<smem>>
    %c14_14 = arith.constant 14 : index
    %78 = memref.load %arg3[%c14_14] : memref<64xf32, #tpu.memory_space<smem>>
    %c15_15 = arith.constant 15 : index
    %79 = memref.load %arg3[%c15_15] : memref<64xf32, #tpu.memory_space<smem>>
    %c16_16 = arith.constant 16 : index
    %80 = memref.load %arg3[%c16_16] : memref<64xf32, #tpu.memory_space<smem>>
    %c17_17 = arith.constant 17 : index
    %81 = memref.load %arg3[%c17_17] : memref<64xf32, #tpu.memory_space<smem>>
    %c18_18 = arith.constant 18 : index
    %82 = memref.load %arg3[%c18_18] : memref<64xf32, #tpu.memory_space<smem>>
    %c19_19 = arith.constant 19 : index
    %83 = memref.load %arg3[%c19_19] : memref<64xf32, #tpu.memory_space<smem>>
    %c20_20 = arith.constant 20 : index
    %84 = memref.load %arg3[%c20_20] : memref<64xf32, #tpu.memory_space<smem>>
    %c21_21 = arith.constant 21 : index
    %85 = memref.load %arg3[%c21_21] : memref<64xf32, #tpu.memory_space<smem>>
    %c22_22 = arith.constant 22 : index
    %86 = memref.load %arg3[%c22_22] : memref<64xf32, #tpu.memory_space<smem>>
    %c23_23 = arith.constant 23 : index
    %87 = memref.load %arg3[%c23_23] : memref<64xf32, #tpu.memory_space<smem>>
    %c24_24 = arith.constant 24 : index
    %88 = memref.load %arg3[%c24_24] : memref<64xf32, #tpu.memory_space<smem>>
    %c25_25 = arith.constant 25 : index
    %89 = memref.load %arg3[%c25_25] : memref<64xf32, #tpu.memory_space<smem>>
    %c26_26 = arith.constant 26 : index
    %90 = memref.load %arg3[%c26_26] : memref<64xf32, #tpu.memory_space<smem>>
    %c27_27 = arith.constant 27 : index
    %91 = memref.load %arg3[%c27_27] : memref<64xf32, #tpu.memory_space<smem>>
    %c28_28 = arith.constant 28 : index
    %92 = memref.load %arg3[%c28_28] : memref<64xf32, #tpu.memory_space<smem>>
    %c29_29 = arith.constant 29 : index
    %93 = memref.load %arg3[%c29_29] : memref<64xf32, #tpu.memory_space<smem>>
    %c30_30 = arith.constant 30 : index
    %94 = memref.load %arg3[%c30_30] : memref<64xf32, #tpu.memory_space<smem>>
    %c31_31 = arith.constant 31 : index
    %95 = memref.load %arg3[%c31_31] : memref<64xf32, #tpu.memory_space<smem>>
    %c32_32 = arith.constant 32 : index
    %96 = memref.load %arg3[%c32_32] : memref<64xf32, #tpu.memory_space<smem>>
    %c33_33 = arith.constant 33 : index
    %97 = memref.load %arg3[%c33_33] : memref<64xf32, #tpu.memory_space<smem>>
    %c34_34 = arith.constant 34 : index
    %98 = memref.load %arg3[%c34_34] : memref<64xf32, #tpu.memory_space<smem>>
    %c35_35 = arith.constant 35 : index
    %99 = memref.load %arg3[%c35_35] : memref<64xf32, #tpu.memory_space<smem>>
    %c36_36 = arith.constant 36 : index
    %100 = memref.load %arg3[%c36_36] : memref<64xf32, #tpu.memory_space<smem>>
    %c37_37 = arith.constant 37 : index
    %101 = memref.load %arg3[%c37_37] : memref<64xf32, #tpu.memory_space<smem>>
    %c38_38 = arith.constant 38 : index
    %102 = memref.load %arg3[%c38_38] : memref<64xf32, #tpu.memory_space<smem>>
    %c39_39 = arith.constant 39 : index
    %103 = memref.load %arg3[%c39_39] : memref<64xf32, #tpu.memory_space<smem>>
    %c40_40 = arith.constant 40 : index
    %104 = memref.load %arg3[%c40_40] : memref<64xf32, #tpu.memory_space<smem>>
    %c41_41 = arith.constant 41 : index
    %105 = memref.load %arg3[%c41_41] : memref<64xf32, #tpu.memory_space<smem>>
    %c42_42 = arith.constant 42 : index
    %106 = memref.load %arg3[%c42_42] : memref<64xf32, #tpu.memory_space<smem>>
    %c43_43 = arith.constant 43 : index
    %107 = memref.load %arg3[%c43_43] : memref<64xf32, #tpu.memory_space<smem>>
    %c44_44 = arith.constant 44 : index
    %108 = memref.load %arg3[%c44_44] : memref<64xf32, #tpu.memory_space<smem>>
    %c45_45 = arith.constant 45 : index
    %109 = memref.load %arg3[%c45_45] : memref<64xf32, #tpu.memory_space<smem>>
    %c46_46 = arith.constant 46 : index
    %110 = memref.load %arg3[%c46_46] : memref<64xf32, #tpu.memory_space<smem>>
    %c47_47 = arith.constant 47 : index
    %111 = memref.load %arg3[%c47_47] : memref<64xf32, #tpu.memory_space<smem>>
    %c48_48 = arith.constant 48 : index
    %112 = memref.load %arg3[%c48_48] : memref<64xf32, #tpu.memory_space<smem>>
    %c49_49 = arith.constant 49 : index
    %113 = memref.load %arg3[%c49_49] : memref<64xf32, #tpu.memory_space<smem>>
    %c50_50 = arith.constant 50 : index
    %114 = memref.load %arg3[%c50_50] : memref<64xf32, #tpu.memory_space<smem>>
    %c51_51 = arith.constant 51 : index
    %115 = memref.load %arg3[%c51_51] : memref<64xf32, #tpu.memory_space<smem>>
    %c52_52 = arith.constant 52 : index
    %116 = memref.load %arg3[%c52_52] : memref<64xf32, #tpu.memory_space<smem>>
    %c53_53 = arith.constant 53 : index
    %117 = memref.load %arg3[%c53_53] : memref<64xf32, #tpu.memory_space<smem>>
    %c54_54 = arith.constant 54 : index
    %118 = memref.load %arg3[%c54_54] : memref<64xf32, #tpu.memory_space<smem>>
    %c55_55 = arith.constant 55 : index
    %119 = memref.load %arg3[%c55_55] : memref<64xf32, #tpu.memory_space<smem>>
    %c56_56 = arith.constant 56 : index
    %120 = memref.load %arg3[%c56_56] : memref<64xf32, #tpu.memory_space<smem>>
    %c57_57 = arith.constant 57 : index
    %121 = memref.load %arg3[%c57_57] : memref<64xf32, #tpu.memory_space<smem>>
    %c58_58 = arith.constant 58 : index
    %122 = memref.load %arg3[%c58_58] : memref<64xf32, #tpu.memory_space<smem>>
    %c59_59 = arith.constant 59 : index
    %123 = memref.load %arg3[%c59_59] : memref<64xf32, #tpu.memory_space<smem>>
    %c60_60 = arith.constant 60 : index
    %124 = memref.load %arg3[%c60_60] : memref<64xf32, #tpu.memory_space<smem>>
    %c61_61 = arith.constant 61 : index
    %125 = memref.load %arg3[%c61_61] : memref<64xf32, #tpu.memory_space<smem>>
    %c62_62 = arith.constant 62 : index
    %126 = memref.load %arg3[%c62_62] : memref<64xf32, #tpu.memory_space<smem>>
    %c63_63 = arith.constant 63 : index
    %127 = memref.load %arg3[%c63_63] : memref<64xf32, #tpu.memory_space<smem>>
    %c0_64 = arith.constant 0 : index
    %128 = memref.load %arg4[%c0_64] : memref<1xf32, #tpu.memory_space<smem>>
    %129 = vector.broadcast %128 : f32 to vector<32x128xf32>
    %cst = arith.constant 0.000000e+00 : f32
    %130 = vector.broadcast %cst : f32 to vector<32x128xf32>
    %c0_i32 = arith.constant 0 : i32
    %c32_i32 = arith.constant 32 : i32
    %131 = arith.muli %c0_i32, %c32_i32 : i32
    %132 = tpu.assume_multiple %131, 32 : i32
    %133 = arith.index_cast %132 : i32 to index
    %c0_65 = arith.constant 0 : index
    %134 = vector.load %arg1[%133, %c0_65] : memref<32x128xf32, #tpu.memory_space<vmem>>, vector<32x128xf32>
    %135 = vector.broadcast %0 : f32 to vector<32x128xf32>
    %136 = arith.mulf %134, %135 : vector<32x128xf32>
    %137 = vector.broadcast %64 : f32 to vector<32x128xf32>
    %138 = arith.addf %136, %137 : vector<32x128xf32>
    %cst_66 = arith.constant 0.000000e+00 : f32
    %139 = vector.broadcast %cst_66 : f32 to vector<32x128xf32>
    %140 = arith.maximumf %138, %139 : vector<32x128xf32>
    %141 = arith.addf %129, %140 : vector<32x128xf32>
    %142 = vector.broadcast %1 : f32 to vector<32x128xf32>
    %143 = arith.mulf %134, %142 : vector<32x128xf32>
    %144 = vector.broadcast %65 : f32 to vector<32x128xf32>
    %145 = arith.addf %143, %144 : vector<32x128xf32>
    %cst_67 = arith.constant 0.000000e+00 : f32
    %146 = vector.broadcast %cst_67 : f32 to vector<32x128xf32>
    %147 = arith.maximumf %145, %146 : vector<32x128xf32>
    %148 = arith.addf %130, %147 : vector<32x128xf32>
    %149 = vector.broadcast %2 : f32 to vector<32x128xf32>
    %150 = arith.mulf %134, %149 : vector<32x128xf32>
    %151 = vector.broadcast %66 : f32 to vector<32x128xf32>
    %152 = arith.addf %150, %151 : vector<32x128xf32>
    %cst_68 = arith.constant 0.000000e+00 : f32
    %153 = vector.broadcast %cst_68 : f32 to vector<32x128xf32>
    %154 = arith.maximumf %152, %153 : vector<32x128xf32>
    %155 = arith.addf %141, %154 : vector<32x128xf32>
    %156 = vector.broadcast %3 : f32 to vector<32x128xf32>
    %157 = arith.mulf %134, %156 : vector<32x128xf32>
    %158 = vector.broadcast %67 : f32 to vector<32x128xf32>
    %159 = arith.addf %157, %158 : vector<32x128xf32>
    %cst_69 = arith.constant 0.000000e+00 : f32
    %160 = vector.broadcast %cst_69 : f32 to vector<32x128xf32>
    %161 = arith.maximumf %159, %160 : vector<32x128xf32>
    %162 = arith.addf %148, %161 : vector<32x128xf32>
    %163 = vector.broadcast %4 : f32 to vector<32x128xf32>
    %164 = arith.mulf %134, %163 : vector<32x128xf32>
    %165 = vector.broadcast %68 : f32 to vector<32x128xf32>
    %166 = arith.addf %164, %165 : vector<32x128xf32>
    %cst_70 = arith.constant 0.000000e+00 : f32
    %167 = vector.broadcast %cst_70 : f32 to vector<32x128xf32>
    %168 = arith.maximumf %166, %167 : vector<32x128xf32>
    %169 = arith.addf %155, %168 : vector<32x128xf32>
    %170 = vector.broadcast %5 : f32 to vector<32x128xf32>
    %171 = arith.mulf %134, %170 : vector<32x128xf32>
    %172 = vector.broadcast %69 : f32 to vector<32x128xf32>
    %173 = arith.addf %171, %172 : vector<32x128xf32>
    %cst_71 = arith.constant 0.000000e+00 : f32
    %174 = vector.broadcast %cst_71 : f32 to vector<32x128xf32>
    %175 = arith.maximumf %173, %174 : vector<32x128xf32>
    %176 = arith.addf %162, %175 : vector<32x128xf32>
    %177 = vector.broadcast %6 : f32 to vector<32x128xf32>
    %178 = arith.mulf %134, %177 : vector<32x128xf32>
    %179 = vector.broadcast %70 : f32 to vector<32x128xf32>
    %180 = arith.addf %178, %179 : vector<32x128xf32>
    %cst_72 = arith.constant 0.000000e+00 : f32
    %181 = vector.broadcast %cst_72 : f32 to vector<32x128xf32>
    %182 = arith.maximumf %180, %181 : vector<32x128xf32>
    %183 = arith.addf %169, %182 : vector<32x128xf32>
    %184 = vector.broadcast %7 : f32 to vector<32x128xf32>
    %185 = arith.mulf %134, %184 : vector<32x128xf32>
    %186 = vector.broadcast %71 : f32 to vector<32x128xf32>
    %187 = arith.addf %185, %186 : vector<32x128xf32>
    %cst_73 = arith.constant 0.000000e+00 : f32
    %188 = vector.broadcast %cst_73 : f32 to vector<32x128xf32>
    %189 = arith.maximumf %187, %188 : vector<32x128xf32>
    %190 = arith.addf %176, %189 : vector<32x128xf32>
    %191 = vector.broadcast %8 : f32 to vector<32x128xf32>
    %192 = arith.mulf %134, %191 : vector<32x128xf32>
    %193 = vector.broadcast %72 : f32 to vector<32x128xf32>
    %194 = arith.addf %192, %193 : vector<32x128xf32>
    %cst_74 = arith.constant 0.000000e+00 : f32
    %195 = vector.broadcast %cst_74 : f32 to vector<32x128xf32>
    %196 = arith.maximumf %194, %195 : vector<32x128xf32>
    %197 = arith.addf %183, %196 : vector<32x128xf32>
    %198 = vector.broadcast %9 : f32 to vector<32x128xf32>
    %199 = arith.mulf %134, %198 : vector<32x128xf32>
    %200 = vector.broadcast %73 : f32 to vector<32x128xf32>
    %201 = arith.addf %199, %200 : vector<32x128xf32>
    %cst_75 = arith.constant 0.000000e+00 : f32
    %202 = vector.broadcast %cst_75 : f32 to vector<32x128xf32>
    %203 = arith.maximumf %201, %202 : vector<32x128xf32>
    %204 = arith.addf %190, %203 : vector<32x128xf32>
    %205 = vector.broadcast %10 : f32 to vector<32x128xf32>
    %206 = arith.mulf %134, %205 : vector<32x128xf32>
    %207 = vector.broadcast %74 : f32 to vector<32x128xf32>
    %208 = arith.addf %206, %207 : vector<32x128xf32>
    %cst_76 = arith.constant 0.000000e+00 : f32
    %209 = vector.broadcast %cst_76 : f32 to vector<32x128xf32>
    %210 = arith.maximumf %208, %209 : vector<32x128xf32>
    %211 = arith.addf %197, %210 : vector<32x128xf32>
    %212 = vector.broadcast %11 : f32 to vector<32x128xf32>
    %213 = arith.mulf %134, %212 : vector<32x128xf32>
    %214 = vector.broadcast %75 : f32 to vector<32x128xf32>
    %215 = arith.addf %213, %214 : vector<32x128xf32>
    %cst_77 = arith.constant 0.000000e+00 : f32
    %216 = vector.broadcast %cst_77 : f32 to vector<32x128xf32>
    %217 = arith.maximumf %215, %216 : vector<32x128xf32>
    %218 = arith.addf %204, %217 : vector<32x128xf32>
    %219 = vector.broadcast %12 : f32 to vector<32x128xf32>
    %220 = arith.mulf %134, %219 : vector<32x128xf32>
    %221 = vector.broadcast %76 : f32 to vector<32x128xf32>
    %222 = arith.addf %220, %221 : vector<32x128xf32>
    %cst_78 = arith.constant 0.000000e+00 : f32
    %223 = vector.broadcast %cst_78 : f32 to vector<32x128xf32>
    %224 = arith.maximumf %222, %223 : vector<32x128xf32>
    %225 = arith.addf %211, %224 : vector<32x128xf32>
    %226 = vector.broadcast %13 : f32 to vector<32x128xf32>
    %227 = arith.mulf %134, %226 : vector<32x128xf32>
    %228 = vector.broadcast %77 : f32 to vector<32x128xf32>
    %229 = arith.addf %227, %228 : vector<32x128xf32>
    %cst_79 = arith.constant 0.000000e+00 : f32
    %230 = vector.broadcast %cst_79 : f32 to vector<32x128xf32>
    %231 = arith.maximumf %229, %230 : vector<32x128xf32>
    %232 = arith.addf %218, %231 : vector<32x128xf32>
    %233 = vector.broadcast %14 : f32 to vector<32x128xf32>
    %234 = arith.mulf %134, %233 : vector<32x128xf32>
    %235 = vector.broadcast %78 : f32 to vector<32x128xf32>
    %236 = arith.addf %234, %235 : vector<32x128xf32>
    %cst_80 = arith.constant 0.000000e+00 : f32
    %237 = vector.broadcast %cst_80 : f32 to vector<32x128xf32>
    %238 = arith.maximumf %236, %237 : vector<32x128xf32>
    %239 = arith.addf %225, %238 : vector<32x128xf32>
    %240 = vector.broadcast %15 : f32 to vector<32x128xf32>
    %241 = arith.mulf %134, %240 : vector<32x128xf32>
    %242 = vector.broadcast %79 : f32 to vector<32x128xf32>
    %243 = arith.addf %241, %242 : vector<32x128xf32>
    %cst_81 = arith.constant 0.000000e+00 : f32
    %244 = vector.broadcast %cst_81 : f32 to vector<32x128xf32>
    %245 = arith.maximumf %243, %244 : vector<32x128xf32>
    %246 = arith.addf %232, %245 : vector<32x128xf32>
    %247 = vector.broadcast %16 : f32 to vector<32x128xf32>
    %248 = arith.mulf %134, %247 : vector<32x128xf32>
    %249 = vector.broadcast %80 : f32 to vector<32x128xf32>
    %250 = arith.addf %248, %249 : vector<32x128xf32>
    %cst_82 = arith.constant 0.000000e+00 : f32
    %251 = vector.broadcast %cst_82 : f32 to vector<32x128xf32>
    %252 = arith.maximumf %250, %251 : vector<32x128xf32>
    %253 = arith.addf %239, %252 : vector<32x128xf32>
    %254 = vector.broadcast %17 : f32 to vector<32x128xf32>
    %255 = arith.mulf %134, %254 : vector<32x128xf32>
    %256 = vector.broadcast %81 : f32 to vector<32x128xf32>
    %257 = arith.addf %255, %256 : vector<32x128xf32>
    %cst_83 = arith.constant 0.000000e+00 : f32
    %258 = vector.broadcast %cst_83 : f32 to vector<32x128xf32>
    %259 = arith.maximumf %257, %258 : vector<32x128xf32>
    %260 = arith.addf %246, %259 : vector<32x128xf32>
    %261 = vector.broadcast %18 : f32 to vector<32x128xf32>
    %262 = arith.mulf %134, %261 : vector<32x128xf32>
    %263 = vector.broadcast %82 : f32 to vector<32x128xf32>
    %264 = arith.addf %262, %263 : vector<32x128xf32>
    %cst_84 = arith.constant 0.000000e+00 : f32
    %265 = vector.broadcast %cst_84 : f32 to vector<32x128xf32>
    %266 = arith.maximumf %264, %265 : vector<32x128xf32>
    %267 = arith.addf %253, %266 : vector<32x128xf32>
    %268 = vector.broadcast %19 : f32 to vector<32x128xf32>
    %269 = arith.mulf %134, %268 : vector<32x128xf32>
    %270 = vector.broadcast %83 : f32 to vector<32x128xf32>
    %271 = arith.addf %269, %270 : vector<32x128xf32>
    %cst_85 = arith.constant 0.000000e+00 : f32
    %272 = vector.broadcast %cst_85 : f32 to vector<32x128xf32>
    %273 = arith.maximumf %271, %272 : vector<32x128xf32>
    %274 = arith.addf %260, %273 : vector<32x128xf32>
    %275 = vector.broadcast %20 : f32 to vector<32x128xf32>
    %276 = arith.mulf %134, %275 : vector<32x128xf32>
    %277 = vector.broadcast %84 : f32 to vector<32x128xf32>
    %278 = arith.addf %276, %277 : vector<32x128xf32>
    %cst_86 = arith.constant 0.000000e+00 : f32
    %279 = vector.broadcast %cst_86 : f32 to vector<32x128xf32>
    %280 = arith.maximumf %278, %279 : vector<32x128xf32>
    %281 = arith.addf %267, %280 : vector<32x128xf32>
    %282 = vector.broadcast %21 : f32 to vector<32x128xf32>
    %283 = arith.mulf %134, %282 : vector<32x128xf32>
    %284 = vector.broadcast %85 : f32 to vector<32x128xf32>
    %285 = arith.addf %283, %284 : vector<32x128xf32>
    %cst_87 = arith.constant 0.000000e+00 : f32
    %286 = vector.broadcast %cst_87 : f32 to vector<32x128xf32>
    %287 = arith.maximumf %285, %286 : vector<32x128xf32>
    %288 = arith.addf %274, %287 : vector<32x128xf32>
    %289 = vector.broadcast %22 : f32 to vector<32x128xf32>
    %290 = arith.mulf %134, %289 : vector<32x128xf32>
    %291 = vector.broadcast %86 : f32 to vector<32x128xf32>
    %292 = arith.addf %290, %291 : vector<32x128xf32>
    %cst_88 = arith.constant 0.000000e+00 : f32
    %293 = vector.broadcast %cst_88 : f32 to vector<32x128xf32>
    %294 = arith.maximumf %292, %293 : vector<32x128xf32>
    %295 = arith.addf %281, %294 : vector<32x128xf32>
    %296 = vector.broadcast %23 : f32 to vector<32x128xf32>
    %297 = arith.mulf %134, %296 : vector<32x128xf32>
    %298 = vector.broadcast %87 : f32 to vector<32x128xf32>
    %299 = arith.addf %297, %298 : vector<32x128xf32>
    %cst_89 = arith.constant 0.000000e+00 : f32
    %300 = vector.broadcast %cst_89 : f32 to vector<32x128xf32>
    %301 = arith.maximumf %299, %300 : vector<32x128xf32>
    %302 = arith.addf %288, %301 : vector<32x128xf32>
    %303 = vector.broadcast %24 : f32 to vector<32x128xf32>
    %304 = arith.mulf %134, %303 : vector<32x128xf32>
    %305 = vector.broadcast %88 : f32 to vector<32x128xf32>
    %306 = arith.addf %304, %305 : vector<32x128xf32>
    %cst_90 = arith.constant 0.000000e+00 : f32
    %307 = vector.broadcast %cst_90 : f32 to vector<32x128xf32>
    %308 = arith.maximumf %306, %307 : vector<32x128xf32>
    %309 = arith.addf %295, %308 : vector<32x128xf32>
    %310 = vector.broadcast %25 : f32 to vector<32x128xf32>
    %311 = arith.mulf %134, %310 : vector<32x128xf32>
    %312 = vector.broadcast %89 : f32 to vector<32x128xf32>
    %313 = arith.addf %311, %312 : vector<32x128xf32>
    %cst_91 = arith.constant 0.000000e+00 : f32
    %314 = vector.broadcast %cst_91 : f32 to vector<32x128xf32>
    %315 = arith.maximumf %313, %314 : vector<32x128xf32>
    %316 = arith.addf %302, %315 : vector<32x128xf32>
    %317 = vector.broadcast %26 : f32 to vector<32x128xf32>
    %318 = arith.mulf %134, %317 : vector<32x128xf32>
    %319 = vector.broadcast %90 : f32 to vector<32x128xf32>
    %320 = arith.addf %318, %319 : vector<32x128xf32>
    %cst_92 = arith.constant 0.000000e+00 : f32
    %321 = vector.broadcast %cst_92 : f32 to vector<32x128xf32>
    %322 = arith.maximumf %320, %321 : vector<32x128xf32>
    %323 = arith.addf %309, %322 : vector<32x128xf32>
    %324 = vector.broadcast %27 : f32 to vector<32x128xf32>
    %325 = arith.mulf %134, %324 : vector<32x128xf32>
    %326 = vector.broadcast %91 : f32 to vector<32x128xf32>
    %327 = arith.addf %325, %326 : vector<32x128xf32>
    %cst_93 = arith.constant 0.000000e+00 : f32
    %328 = vector.broadcast %cst_93 : f32 to vector<32x128xf32>
    %329 = arith.maximumf %327, %328 : vector<32x128xf32>
    %330 = arith.addf %316, %329 : vector<32x128xf32>
    %331 = vector.broadcast %28 : f32 to vector<32x128xf32>
    %332 = arith.mulf %134, %331 : vector<32x128xf32>
    %333 = vector.broadcast %92 : f32 to vector<32x128xf32>
    %334 = arith.addf %332, %333 : vector<32x128xf32>
    %cst_94 = arith.constant 0.000000e+00 : f32
    %335 = vector.broadcast %cst_94 : f32 to vector<32x128xf32>
    %336 = arith.maximumf %334, %335 : vector<32x128xf32>
    %337 = arith.addf %323, %336 : vector<32x128xf32>
    %338 = vector.broadcast %29 : f32 to vector<32x128xf32>
    %339 = arith.mulf %134, %338 : vector<32x128xf32>
    %340 = vector.broadcast %93 : f32 to vector<32x128xf32>
    %341 = arith.addf %339, %340 : vector<32x128xf32>
    %cst_95 = arith.constant 0.000000e+00 : f32
    %342 = vector.broadcast %cst_95 : f32 to vector<32x128xf32>
    %343 = arith.minimumf %341, %342 : vector<32x128xf32>
    %344 = arith.addf %330, %343 : vector<32x128xf32>
    %345 = vector.broadcast %30 : f32 to vector<32x128xf32>
    %346 = arith.mulf %134, %345 : vector<32x128xf32>
    %347 = vector.broadcast %94 : f32 to vector<32x128xf32>
    %348 = arith.addf %346, %347 : vector<32x128xf32>
    %cst_96 = arith.constant 0.000000e+00 : f32
    %349 = vector.broadcast %cst_96 : f32 to vector<32x128xf32>
    %350 = arith.minimumf %348, %349 : vector<32x128xf32>
    %351 = arith.addf %337, %350 : vector<32x128xf32>
    %352 = vector.broadcast %31 : f32 to vector<32x128xf32>
    %353 = arith.mulf %134, %352 : vector<32x128xf32>
    %354 = vector.broadcast %95 : f32 to vector<32x128xf32>
    %355 = arith.addf %353, %354 : vector<32x128xf32>
    %cst_97 = arith.constant 0.000000e+00 : f32
    %356 = vector.broadcast %cst_97 : f32 to vector<32x128xf32>
    %357 = arith.minimumf %355, %356 : vector<32x128xf32>
    %358 = arith.addf %344, %357 : vector<32x128xf32>
    %359 = vector.broadcast %32 : f32 to vector<32x128xf32>
    %360 = arith.mulf %134, %359 : vector<32x128xf32>
    %361 = vector.broadcast %96 : f32 to vector<32x128xf32>
    %362 = arith.addf %360, %361 : vector<32x128xf32>
    %cst_98 = arith.constant 0.000000e+00 : f32
    %363 = vector.broadcast %cst_98 : f32 to vector<32x128xf32>
    %364 = arith.minimumf %362, %363 : vector<32x128xf32>
    %365 = arith.addf %351, %364 : vector<32x128xf32>
    %366 = vector.broadcast %33 : f32 to vector<32x128xf32>
    %367 = arith.mulf %134, %366 : vector<32x128xf32>
    %368 = vector.broadcast %97 : f32 to vector<32x128xf32>
    %369 = arith.addf %367, %368 : vector<32x128xf32>
    %cst_99 = arith.constant 0.000000e+00 : f32
    %370 = vector.broadcast %cst_99 : f32 to vector<32x128xf32>
    %371 = arith.minimumf %369, %370 : vector<32x128xf32>
    %372 = arith.addf %358, %371 : vector<32x128xf32>
    %373 = vector.broadcast %34 : f32 to vector<32x128xf32>
    %374 = arith.mulf %134, %373 : vector<32x128xf32>
    %375 = vector.broadcast %98 : f32 to vector<32x128xf32>
    %376 = arith.addf %374, %375 : vector<32x128xf32>
    %cst_100 = arith.constant 0.000000e+00 : f32
    %377 = vector.broadcast %cst_100 : f32 to vector<32x128xf32>
    %378 = arith.minimumf %376, %377 : vector<32x128xf32>
    %379 = arith.addf %365, %378 : vector<32x128xf32>
    %380 = vector.broadcast %35 : f32 to vector<32x128xf32>
    %381 = arith.mulf %134, %380 : vector<32x128xf32>
    %382 = vector.broadcast %99 : f32 to vector<32x128xf32>
    %383 = arith.addf %381, %382 : vector<32x128xf32>
    %cst_101 = arith.constant 0.000000e+00 : f32
    %384 = vector.broadcast %cst_101 : f32 to vector<32x128xf32>
    %385 = arith.minimumf %383, %384 : vector<32x128xf32>
    %386 = arith.addf %372, %385 : vector<32x128xf32>
    %387 = vector.broadcast %36 : f32 to vector<32x128xf32>
    %388 = arith.mulf %134, %387 : vector<32x128xf32>
    %389 = vector.broadcast %100 : f32 to vector<32x128xf32>
    %390 = arith.addf %388, %389 : vector<32x128xf32>
    %cst_102 = arith.constant 0.000000e+00 : f32
    %391 = vector.broadcast %cst_102 : f32 to vector<32x128xf32>
    %392 = arith.minimumf %390, %391 : vector<32x128xf32>
    %393 = arith.addf %379, %392 : vector<32x128xf32>
    %394 = vector.broadcast %37 : f32 to vector<32x128xf32>
    %395 = arith.mulf %134, %394 : vector<32x128xf32>
    %396 = vector.broadcast %101 : f32 to vector<32x128xf32>
    %397 = arith.addf %395, %396 : vector<32x128xf32>
    %cst_103 = arith.constant 0.000000e+00 : f32
    %398 = vector.broadcast %cst_103 : f32 to vector<32x128xf32>
    %399 = arith.minimumf %397, %398 : vector<32x128xf32>
    %400 = arith.addf %386, %399 : vector<32x128xf32>
    %401 = vector.broadcast %38 : f32 to vector<32x128xf32>
    %402 = arith.mulf %134, %401 : vector<32x128xf32>
    %403 = vector.broadcast %102 : f32 to vector<32x128xf32>
    %404 = arith.addf %402, %403 : vector<32x128xf32>
    %cst_104 = arith.constant 0.000000e+00 : f32
    %405 = vector.broadcast %cst_104 : f32 to vector<32x128xf32>
    %406 = arith.minimumf %404, %405 : vector<32x128xf32>
    %407 = arith.addf %393, %406 : vector<32x128xf32>
    %408 = vector.broadcast %39 : f32 to vector<32x128xf32>
    %409 = arith.mulf %134, %408 : vector<32x128xf32>
    %410 = vector.broadcast %103 : f32 to vector<32x128xf32>
    %411 = arith.addf %409, %410 : vector<32x128xf32>
    %cst_105 = arith.constant 0.000000e+00 : f32
    %412 = vector.broadcast %cst_105 : f32 to vector<32x128xf32>
    %413 = arith.minimumf %411, %412 : vector<32x128xf32>
    %414 = arith.addf %400, %413 : vector<32x128xf32>
    %415 = vector.broadcast %40 : f32 to vector<32x128xf32>
    %416 = arith.mulf %134, %415 : vector<32x128xf32>
    %417 = vector.broadcast %104 : f32 to vector<32x128xf32>
    %418 = arith.addf %416, %417 : vector<32x128xf32>
    %cst_106 = arith.constant 0.000000e+00 : f32
    %419 = vector.broadcast %cst_106 : f32 to vector<32x128xf32>
    %420 = arith.minimumf %418, %419 : vector<32x128xf32>
    %421 = arith.addf %407, %420 : vector<32x128xf32>
    %422 = vector.broadcast %41 : f32 to vector<32x128xf32>
    %423 = arith.mulf %134, %422 : vector<32x128xf32>
    %424 = vector.broadcast %105 : f32 to vector<32x128xf32>
    %425 = arith.addf %423, %424 : vector<32x128xf32>
    %cst_107 = arith.constant 0.000000e+00 : f32
    %426 = vector.broadcast %cst_107 : f32 to vector<32x128xf32>
    %427 = arith.minimumf %425, %426 : vector<32x128xf32>
    %428 = arith.addf %414, %427 : vector<32x128xf32>
    %429 = vector.broadcast %42 : f32 to vector<32x128xf32>
    %430 = arith.mulf %134, %429 : vector<32x128xf32>
    %431 = vector.broadcast %106 : f32 to vector<32x128xf32>
    %432 = arith.addf %430, %431 : vector<32x128xf32>
    %cst_108 = arith.constant 0.000000e+00 : f32
    %433 = vector.broadcast %cst_108 : f32 to vector<32x128xf32>
    %434 = arith.minimumf %432, %433 : vector<32x128xf32>
    %435 = arith.addf %421, %434 : vector<32x128xf32>
    %436 = vector.broadcast %43 : f32 to vector<32x128xf32>
    %437 = arith.mulf %134, %436 : vector<32x128xf32>
    %438 = vector.broadcast %107 : f32 to vector<32x128xf32>
    %439 = arith.addf %437, %438 : vector<32x128xf32>
    %cst_109 = arith.constant 0.000000e+00 : f32
    %440 = vector.broadcast %cst_109 : f32 to vector<32x128xf32>
    %441 = arith.minimumf %439, %440 : vector<32x128xf32>
    %442 = arith.addf %428, %441 : vector<32x128xf32>
    %443 = vector.broadcast %44 : f32 to vector<32x128xf32>
    %444 = arith.mulf %134, %443 : vector<32x128xf32>
    %445 = vector.broadcast %108 : f32 to vector<32x128xf32>
    %446 = arith.addf %444, %445 : vector<32x128xf32>
    %cst_110 = arith.constant 0.000000e+00 : f32
    %447 = vector.broadcast %cst_110 : f32 to vector<32x128xf32>
    %448 = arith.minimumf %446, %447 : vector<32x128xf32>
    %449 = arith.addf %435, %448 : vector<32x128xf32>
    %450 = vector.broadcast %45 : f32 to vector<32x128xf32>
    %451 = arith.mulf %134, %450 : vector<32x128xf32>
    %452 = vector.broadcast %109 : f32 to vector<32x128xf32>
    %453 = arith.addf %451, %452 : vector<32x128xf32>
    %cst_111 = arith.constant 0.000000e+00 : f32
    %454 = vector.broadcast %cst_111 : f32 to vector<32x128xf32>
    %455 = arith.minimumf %453, %454 : vector<32x128xf32>
    %456 = arith.addf %442, %455 : vector<32x128xf32>
    %457 = vector.broadcast %46 : f32 to vector<32x128xf32>
    %458 = arith.mulf %134, %457 : vector<32x128xf32>
    %459 = vector.broadcast %110 : f32 to vector<32x128xf32>
    %460 = arith.addf %458, %459 : vector<32x128xf32>
    %cst_112 = arith.constant 0.000000e+00 : f32
    %461 = vector.broadcast %cst_112 : f32 to vector<32x128xf32>
    %462 = arith.minimumf %460, %461 : vector<32x128xf32>
    %463 = arith.addf %449, %462 : vector<32x128xf32>
    %464 = vector.broadcast %47 : f32 to vector<32x128xf32>
    %465 = arith.mulf %134, %464 : vector<32x128xf32>
    %466 = vector.broadcast %111 : f32 to vector<32x128xf32>
    %467 = arith.addf %465, %466 : vector<32x128xf32>
    %cst_113 = arith.constant 0.000000e+00 : f32
    %468 = vector.broadcast %cst_113 : f32 to vector<32x128xf32>
    %469 = arith.minimumf %467, %468 : vector<32x128xf32>
    %470 = arith.addf %456, %469 : vector<32x128xf32>
    %471 = vector.broadcast %48 : f32 to vector<32x128xf32>
    %472 = arith.mulf %134, %471 : vector<32x128xf32>
    %473 = vector.broadcast %112 : f32 to vector<32x128xf32>
    %474 = arith.addf %472, %473 : vector<32x128xf32>
    %cst_114 = arith.constant 0.000000e+00 : f32
    %475 = vector.broadcast %cst_114 : f32 to vector<32x128xf32>
    %476 = arith.minimumf %474, %475 : vector<32x128xf32>
    %477 = arith.addf %463, %476 : vector<32x128xf32>
    %478 = vector.broadcast %49 : f32 to vector<32x128xf32>
    %479 = arith.mulf %134, %478 : vector<32x128xf32>
    %480 = vector.broadcast %113 : f32 to vector<32x128xf32>
    %481 = arith.addf %479, %480 : vector<32x128xf32>
    %cst_115 = arith.constant 0.000000e+00 : f32
    %482 = vector.broadcast %cst_115 : f32 to vector<32x128xf32>
    %483 = arith.minimumf %481, %482 : vector<32x128xf32>
    %484 = arith.addf %470, %483 : vector<32x128xf32>
    %485 = vector.broadcast %50 : f32 to vector<32x128xf32>
    %486 = arith.mulf %134, %485 : vector<32x128xf32>
    %487 = vector.broadcast %114 : f32 to vector<32x128xf32>
    %488 = arith.addf %486, %487 : vector<32x128xf32>
    %cst_116 = arith.constant 0.000000e+00 : f32
    %489 = vector.broadcast %cst_116 : f32 to vector<32x128xf32>
    %490 = arith.minimumf %488, %489 : vector<32x128xf32>
    %491 = arith.addf %477, %490 : vector<32x128xf32>
    %492 = vector.broadcast %51 : f32 to vector<32x128xf32>
    %493 = arith.mulf %134, %492 : vector<32x128xf32>
    %494 = vector.broadcast %115 : f32 to vector<32x128xf32>
    %495 = arith.addf %493, %494 : vector<32x128xf32>
    %cst_117 = arith.constant 0.000000e+00 : f32
    %496 = vector.broadcast %cst_117 : f32 to vector<32x128xf32>
    %497 = arith.minimumf %495, %496 : vector<32x128xf32>
    %498 = arith.addf %484, %497 : vector<32x128xf32>
    %499 = vector.broadcast %52 : f32 to vector<32x128xf32>
    %500 = arith.mulf %134, %499 : vector<32x128xf32>
    %501 = vector.broadcast %116 : f32 to vector<32x128xf32>
    %502 = arith.addf %500, %501 : vector<32x128xf32>
    %cst_118 = arith.constant 0.000000e+00 : f32
    %503 = vector.broadcast %cst_118 : f32 to vector<32x128xf32>
    %504 = arith.minimumf %502, %503 : vector<32x128xf32>
    %505 = arith.addf %491, %504 : vector<32x128xf32>
    %506 = vector.broadcast %53 : f32 to vector<32x128xf32>
    %507 = arith.mulf %134, %506 : vector<32x128xf32>
    %508 = vector.broadcast %117 : f32 to vector<32x128xf32>
    %509 = arith.addf %507, %508 : vector<32x128xf32>
    %cst_119 = arith.constant 0.000000e+00 : f32
    %510 = vector.broadcast %cst_119 : f32 to vector<32x128xf32>
    %511 = arith.minimumf %509, %510 : vector<32x128xf32>
    %512 = arith.addf %498, %511 : vector<32x128xf32>
    %513 = vector.broadcast %54 : f32 to vector<32x128xf32>
    %514 = arith.mulf %134, %513 : vector<32x128xf32>
    %515 = vector.broadcast %118 : f32 to vector<32x128xf32>
    %516 = arith.addf %514, %515 : vector<32x128xf32>
    %cst_120 = arith.constant 0.000000e+00 : f32
    %517 = vector.broadcast %cst_120 : f32 to vector<32x128xf32>
    %518 = arith.minimumf %516, %517 : vector<32x128xf32>
    %519 = arith.addf %505, %518 : vector<32x128xf32>
    %520 = vector.broadcast %55 : f32 to vector<32x128xf32>
    %521 = arith.mulf %134, %520 : vector<32x128xf32>
    %522 = vector.broadcast %119 : f32 to vector<32x128xf32>
    %523 = arith.addf %521, %522 : vector<32x128xf32>
    %cst_121 = arith.constant 0.000000e+00 : f32
    %524 = vector.broadcast %cst_121 : f32 to vector<32x128xf32>
    %525 = arith.minimumf %523, %524 : vector<32x128xf32>
    %526 = arith.addf %512, %525 : vector<32x128xf32>
    %527 = vector.broadcast %56 : f32 to vector<32x128xf32>
    %528 = arith.mulf %134, %527 : vector<32x128xf32>
    %529 = vector.broadcast %120 : f32 to vector<32x128xf32>
    %530 = arith.addf %528, %529 : vector<32x128xf32>
    %cst_122 = arith.constant 0.000000e+00 : f32
    %531 = vector.broadcast %cst_122 : f32 to vector<32x128xf32>
    %532 = arith.minimumf %530, %531 : vector<32x128xf32>
    %533 = arith.addf %519, %532 : vector<32x128xf32>
    %534 = vector.broadcast %57 : f32 to vector<32x128xf32>
    %535 = arith.mulf %134, %534 : vector<32x128xf32>
    %536 = vector.broadcast %121 : f32 to vector<32x128xf32>
    %537 = arith.addf %535, %536 : vector<32x128xf32>
    %cst_123 = arith.constant 0.000000e+00 : f32
    %538 = vector.broadcast %cst_123 : f32 to vector<32x128xf32>
    %539 = arith.minimumf %537, %538 : vector<32x128xf32>
    %540 = arith.addf %526, %539 : vector<32x128xf32>
    %541 = vector.broadcast %58 : f32 to vector<32x128xf32>
    %542 = arith.mulf %134, %541 : vector<32x128xf32>
    %543 = vector.broadcast %122 : f32 to vector<32x128xf32>
    %544 = arith.addf %542, %543 : vector<32x128xf32>
    %cst_124 = arith.constant 0.000000e+00 : f32
    %545 = vector.broadcast %cst_124 : f32 to vector<32x128xf32>
    %546 = arith.minimumf %544, %545 : vector<32x128xf32>
    %547 = arith.addf %533, %546 : vector<32x128xf32>
    %548 = vector.broadcast %59 : f32 to vector<32x128xf32>
    %549 = arith.mulf %134, %548 : vector<32x128xf32>
    %550 = vector.broadcast %123 : f32 to vector<32x128xf32>
    %551 = arith.addf %549, %550 : vector<32x128xf32>
    %cst_125 = arith.constant 0.000000e+00 : f32
    %552 = vector.broadcast %cst_125 : f32 to vector<32x128xf32>
    %553 = arith.minimumf %551, %552 : vector<32x128xf32>
    %554 = arith.addf %540, %553 : vector<32x128xf32>
    %555 = vector.broadcast %60 : f32 to vector<32x128xf32>
    %556 = arith.mulf %134, %555 : vector<32x128xf32>
    %557 = vector.broadcast %124 : f32 to vector<32x128xf32>
    %558 = arith.addf %556, %557 : vector<32x128xf32>
    %cst_126 = arith.constant 0.000000e+00 : f32
    %559 = vector.broadcast %cst_126 : f32 to vector<32x128xf32>
    %560 = arith.minimumf %558, %559 : vector<32x128xf32>
    %561 = arith.addf %547, %560 : vector<32x128xf32>
    %562 = vector.broadcast %61 : f32 to vector<32x128xf32>
    %563 = arith.mulf %134, %562 : vector<32x128xf32>
    %564 = vector.broadcast %125 : f32 to vector<32x128xf32>
    %565 = arith.addf %563, %564 : vector<32x128xf32>
    %cst_127 = arith.constant 0.000000e+00 : f32
    %566 = vector.broadcast %cst_127 : f32 to vector<32x128xf32>
    %567 = arith.minimumf %565, %566 : vector<32x128xf32>
    %568 = arith.addf %554, %567 : vector<32x128xf32>
    %569 = vector.broadcast %62 : f32 to vector<32x128xf32>
    %570 = arith.mulf %134, %569 : vector<32x128xf32>
    %571 = vector.broadcast %126 : f32 to vector<32x128xf32>
    %572 = arith.addf %570, %571 : vector<32x128xf32>
    %cst_128 = arith.constant 0.000000e+00 : f32
    %573 = vector.broadcast %cst_128 : f32 to vector<32x128xf32>
    %574 = arith.minimumf %572, %573 : vector<32x128xf32>
    %575 = arith.addf %561, %574 : vector<32x128xf32>
    %576 = vector.broadcast %63 : f32 to vector<32x128xf32>
    %577 = arith.mulf %134, %576 : vector<32x128xf32>
    %578 = vector.broadcast %127 : f32 to vector<32x128xf32>
    %579 = arith.addf %577, %578 : vector<32x128xf32>
    %cst_129 = arith.constant 0.000000e+00 : f32
    %580 = vector.broadcast %cst_129 : f32 to vector<32x128xf32>
    %581 = arith.minimumf %579, %580 : vector<32x128xf32>
    %582 = arith.addf %568, %581 : vector<32x128xf32>
    %583 = arith.addf %575, %582 : vector<32x128xf32>
    %584 = arith.index_cast %132 : i32 to index
    %c0_130 = arith.constant 0 : index
    %585 = vector.load %arg5[%584, %c0_130] : memref<32x128xf32, #tpu.memory_space<vmem>>, vector<32x128xf32>
    tpu.vector_store %arg5[%584, %c0_130], %583 {strides = array<i32>} : memref<32x128xf32, #tpu.memory_space<vmem>>, vector<32x128xf32>,
    %c1_i32 = arith.constant 1 : i32
    return
  }
  func.func @transform_0(%arg0: i32) -> (i32, i32) {
    %c0_i32 = arith.constant 0 : i32
    %c0_i32_0 = arith.constant 0 : i32
    return %arg0, %c0_i32 : i32, i32
  }
  func.func @transform_1(%arg0: i32) -> i32 {
    %c0_i32 = arith.constant 0 : i32
    %c0_i32_0 = arith.constant 0 : i32
    return %c0_i32 : i32
  }
  func.func @transform_2(%arg0: i32) -> i32 {
    %c0_i32 = arith.constant 0 : i32
    %c0_i32_0 = arith.constant 0 : i32
    return %c0_i32 : i32
  }
  func.func @transform_3(%arg0: i32) -> i32 {
    %c0_i32 = arith.constant 0 : i32
    %c0_i32_0 = arith.constant 0 : i32
    return %c0_i32 : i32
  }
  func.func @transform_4(%arg0: i32) -> (i32, i32) {
    %c0_i32 = arith.constant 0 : i32
    %c0_i32_0 = arith.constant 0 : i32
    return %arg0, %c0_i32 : i32, i32
  }
}

</mosaic_0001>

<llo_original>
// kernel: tpu_custom_call.1
$region0: #{tpu_custom_call.1}
  #allocation0 [shape = 'u32[]', space=smem, size = 0x4, offset = 0x4, fixed_abs, tag = 'smem constant byte address 0x4 - core index']
  #allocation1 [shape = 'u32[144,128]{1,0:T(1,128)}', space=vmem, size = 0x12000, scoped, tag = 'internal scratch']
  #allocation2 [shape = 'f32[1]{0:T(128)S(6)}', space=smem, size = 0x200, scoped, tag = 'scoped memory for tpu_custom_call.1']
  %s0 = inlined_call_operand.hbm [shape: f32[32,128], index: 0, kind: input, shape index: {}]
  %s1 = inlined_call_operand.vmem [shape: f32[64], index: 1, kind: input, shape index: {}]
  %s2 = inlined_call_operand.vmem [shape: f32[64], index: 2, kind: input, shape index: {}]
  %s3 = inlined_call_operand.<no memory space> [shape: f32[1], index: 3, kind: input, shape index: {}]
  %s4 = inlined_call_operand.hbm [shape: f32[32,128], index: 4, kind: output, shape index: {}]
  %s5 = sld [smem:[#allocation0]]
  $region38: #{tpu_custom_call.1} parent=0
    _
  %s7 = ssub.s32 1, %s5
  %s8 = scalar_select 0, %s7, %s5
  %9 = sst [smem:[#allocation2]] %s3
  $region1: #{tpu_custom_call.1} parent=0
    #allocation3 [shape = 'u8[16384]{0}', space=vmem, size = 0x4000, scoped, tag = 'input window, operand 0, single buffered']
    #allocation4 [shape = 's32[1]{0}', space=sflag, size = 0x4, scoped, tag = 'scoped memory for tpu_custom_call.1']
    #allocation5 [shape = 's32[1]{0}', space=sflag, size = 0x4, scoped, tag = 'scoped memory for tpu_custom_call.1']
    #allocation6 [shape = 's32[1]{0}', space=sflag, size = 0x4, scoped, tag = 'scoped memory for tpu_custom_call.1']
    #allocation7 [shape = 'u8[512]{0}', space=smem, size = 0x200, scoped, tag = 'input window, operand 1, single buffered']
    #allocation8 [shape = 'u8[512]{0}', space=smem, size = 0x200, scoped, tag = 'input window, operand 2, single buffered']
    #allocation9 [shape = 's32[1]{0}', space=sflag, size = 0x4, scoped, tag = 'scoped memory for tpu_custom_call.1']
    #allocation10 [shape = 'u8[16384]{0}', space=vmem, size = 0x4000, scoped, tag = 'output window, operand 0, single buffered']
    %10 = vsyncpa [#allocation4], 0
    %11 = vsyncpa [#allocation6], 0
    %12 = vsyncpa [#allocation9], 0
    %13 = vsyncpa [#allocation5], 0
    // Predicated region
    $region2: #{tpu_custom_call.1} parent=1 // pred_check
      _
    $region3: #{tpu_custom_call.1} parent=1 // pred_check_branch
      %15 = sbr.rel (0) target = $region5
    $region4: #{tpu_custom_call.1} parent=1 // pred_region
      %s17 = ssub.s32 512, 512
      %18 = vsyncadd [#allocation4], %s17
      %s19 = sshll.u32 [#allocation3], 4
      %s20 = int_to_ptr.vmem [resolvable:$true] %s19
      %25 = dma.hbm_to_vmem [thread:$0]  %s0, 512, %s20, [#allocation4], 128, 128, 8
    $region5: #{tpu_custom_call.1} parent=1 // pred_fallthru
      _
    // Predicated region
    $region6: #{tpu_custom_call.1} parent=1 // pred_check
      _
    $region7: #{tpu_custom_call.1} parent=1 // pred_check_branch
      %27 = sbr.rel (0) target = $region9
    $region8: #{tpu_custom_call.1} parent=1 // pred_region
      %s29 = ssub.s32 16, 16
      %30 = vsyncadd [#allocation6], %s29
      %s32 = sshll.u32 %s1, 4
      %s33 = int_to_ptr.vmem [resolvable:$true] %s32
      %35 = dma.vmem_to_smem %s33, 16, [#allocation7], [#allocation6]
    $region9: #{tpu_custom_call.1} parent=1 // pred_fallthru
      _
    // Predicated region
    $region10: #{tpu_custom_call.1} parent=1 // pred_check
      _
    $region11: #{tpu_custom_call.1} parent=1 // pred_check_branch
      %37 = sbr.rel (0) target = $region13
    $region12: #{tpu_custom_call.1} parent=1 // pred_region
      %s39 = ssub.s32 16, 16
      %40 = vsyncadd [#allocation9], %s39
      %s42 = sshll.u32 %s2, 4
      %s43 = int_to_ptr.vmem [resolvable:$true] %s42
      %45 = dma.vmem_to_smem %s43, 16, [#allocation8], [#allocation9]
    $region13: #{tpu_custom_call.1} parent=1 // pred_fallthru
      _
    // Predicated region
    $region14: #{tpu_custom_call.1} parent=1 // pred_check
      _
    $region15: #{tpu_custom_call.1} parent=1 // pred_check_branch
      %47 = sbr.rel (0) target = $region17
    $region16: #{tpu_custom_call.1} parent=1 // pred_region
      _
    $region17: #{tpu_custom_call.1} parent=1 // pred_fallthru
      _
    // Predicated region
    $region18: #{tpu_custom_call.1} parent=1 // pred_check
      _
    $region19: #{tpu_custom_call.1} parent=1 // pred_check_branch
      %49 = sbr.rel (0) target = $region21
    $region20: #{tpu_custom_call.1} parent=1 // pred_region
      %50 = dma.done [#allocation4], 512
    $region21: #{tpu_custom_call.1} parent=1 // pred_fallthru
      _
    // Predicated region
    $region22: #{tpu_custom_call.1} parent=1 // pred_check
      _
    $region23: #{tpu_custom_call.1} parent=1 // pred_check_branch
      %52 = sbr.rel (0) target = $region25
    $region24: #{tpu_custom_call.1} parent=1 // pred_region
      %53 = dma.done [#allocation6], 16
    $region25: #{tpu_custom_call.1} parent=1 // pred_fallthru
      _
    // Predicated region
    $region26: #{tpu_custom_call.1} parent=1 // pred_check
      _
    $region27: #{tpu_custom_call.1} parent=1 // pred_check_branch
      %55 = sbr.rel (0) target = $region29
    $region28: #{tpu_custom_call.1} parent=1 // pred_region
      %56 = dma.done [#allocation9], 16
    $region29: #{tpu_custom_call.1} parent=1 // pred_fallthru
      _
    %57 = sfence
    %s58 = sld [smem:[#allocation7]]
    %s59 = sld [smem:[#allocation7 + $0x1]]
    %s60 = sld [smem:[#allocation7 + $0x2]]
    %s61 = sld [smem:[#allocation7 + $0x3]]
    %s62 = sld [smem:[#allocation7 + $0x4]]
    %s63 = sld [smem:[#allocation7 + $0x5]]
    %s64 = sld [smem:[#allocation7 + $0x6]]
    %s65 = sld [smem:[#allocation7 + $0x7]]
    %s66 = sld [smem:[#allocation7 + $0x8]]
    %s67 = sld [smem:[#allocation7 + $0x9]]
    %s68 = sld [smem:[#allocation7 + $0xa]]
    %s69 = sld [smem:[#allocation7 + $0xb]]
    %s70 = sld [smem:[#allocation7 + $0xc]]
    %s71 = sld [smem:[#allocation7 + $0xd]]
    %s72 = sld [smem:[#allocation7 + $0xe]]
    %s73 = sld [smem:[#allocation7 + $0xf]]
    %s74 = sld [smem:[#allocation7 + $0x10]]
    %s75 = sld [smem:[#allocation7 + $0x11]]
    %s76 = sld [smem:[#allocation7 + $0x12]]
    %s77 = sld [smem:[#allocation7 + $0x13]]
    %s78 = sld [smem:[#allocation7 + $0x14]]
    %s79 = sld [smem:[#allocation7 + $0x15]]
    %s80 = sld [smem:[#allocation7 + $0x16]]
    %s81 = sld [smem:[#allocation7 + $0x17]]
    %s82 = sld [smem:[#allocation7 + $0x18]]
    %s83 = sld [smem:[#allocation7 + $0x19]]
    %s84 = sld [smem:[#allocation7 + $0x1a]]
    %s85 = sld [smem:[#allocation7 + $0x1b]]
    %s86 = sld [smem:[#allocation7 + $0x1c]]
    %s87 = sld [smem:[#allocation7 + $0x1d]]
    %s88 = sld [smem:[#allocation7 + $0x1e]]
    %s89 = sld [smem:[#allocation7 + $0x1f]]
    %s90 = sld [smem:[#allocation7 + $0x20]]
    %s91 = sld [smem:[#allocation7 + $0x21]]
    %s92 = sld [smem:[#allocation7 + $0x22]]
    %s93 = sld [smem:[#allocation7 + $0x23]]
    %s94 = sld [smem:[#allocation7 + $0x24]]
    %s95 = sld [smem:[#allocation7 + $0x25]]
    %s96 = sld [smem:[#allocation7 + $0x26]]
    %s97 = sld [smem:[#allocation7 + $0x27]]
    %s98 = sld [smem:[#allocation7 + $0x28]]
    %s99 = sld [smem:[#allocation7 + $0x29]]
    %s100 = sld [smem:[#allocation7 + $0x2a]]
    %s101 = sld [smem:[#allocation7 + $0x2b]]
    %s102 = sld [smem:[#allocation7 + $0x2c]]
    %s103 = sld [smem:[#allocation7 + $0x2d]]
    %s104 = sld [smem:[#allocation7 + $0x2e]]
    %s105 = sld [smem:[#allocation7 + $0x2f]]
    %s106 = sld [smem:[#allocation7 + $0x30]]
    %s107 = sld [smem:[#allocation7 + $0x31]]
    %s108 = sld [smem:[#allocation7 + $0x32]]
    %s109 = sld [smem:[#allocation7 + $0x33]]
    %s110 = sld [smem:[#allocation7 + $0x34]]
    %s111 = sld [smem:[#allocation7 + $0x35]]
    %s112 = sld [smem:[#allocation7 + $0x36]]
    %s113 = sld [smem:[#allocation7 + $0x37]]
    %s114 = sld [smem:[#allocation7 + $0x38]]
    %s115 = sld [smem:[#allocation7 + $0x39]]
    %s116 = sld [smem:[#allocation7 + $0x3a]]
    %s117 = sld [smem:[#allocation7 + $0x3b]]
    %s118 = sld [smem:[#allocation7 + $0x3c]]
    %s119 = sld [smem:[#allocation7 + $0x3d]]
    %s120 = sld [smem:[#allocation7 + $0x3e]]
    %s121 = sld [smem:[#allocation7 + $0x3f]]
    %s122 = sld [smem:[#allocation8]]
    %s123 = sld [smem:[#allocation8 + $0x1]]
    %s124 = sld [smem:[#allocation8 + $0x2]]
    %s125 = sld [smem:[#allocation8 + $0x3]]
    %s126 = sld [smem:[#allocation8 + $0x4]]
    %s127 = sld [smem:[#allocation8 + $0x5]]
    %s128 = sld [smem:[#allocation8 + $0x6]]
    %s129 = sld [smem:[#allocation8 + $0x7]]
    %s130 = sld [smem:[#allocation8 + $0x8]]
    %s131 = sld [smem:[#allocation8 + $0x9]]
    %s132 = sld [smem:[#allocation8 + $0xa]]
    %s133 = sld [smem:[#allocation8 + $0xb]]
    %s134 = sld [smem:[#allocation8 + $0xc]]
    %s135 = sld [smem:[#allocation8 + $0xd]]
    %s136 = sld [smem:[#allocation8 + $0xe]]
    %s137 = sld [smem:[#allocation8 + $0xf]]
    %s138 = sld [smem:[#allocation8 + $0x10]]
    %s139 = sld [smem:[#allocation8 + $0x11]]
    %s140 = sld [smem:[#allocation8 + $0x12]]
    %s141 = sld [smem:[#allocation8 + $0x13]]
    %s142 = sld [smem:[#allocation8 + $0x14]]
    %s143 = sld [smem:[#allocation8 + $0x15]]
    %s144 = sld [smem:[#allocation8 + $0x16]]
    %s145 = sld [smem:[#allocation8 + $0x17]]
    %s146 = sld [smem:[#allocation8 + $0x18]]
    %s147 = sld [smem:[#allocation8 + $0x19]]
    %s148 = sld [smem:[#allocation8 + $0x1a]]
    %s149 = sld [smem:[#allocation8 + $0x1b]]
    %s150 = sld [smem:[#allocation8 + $0x1c]]
    %s151 = sld [smem:[#allocation8 + $0x1d]]
    %s152 = sld [smem:[#allocation8 + $0x1e]]
    %s153 = sld [smem:[#allocation8 + $0x1f]]
    %s154 = sld [smem:[#allocation8 + $0x20]]
    %s155 = sld [smem:[#allocation8 + $0x21]]
    %s156 = sld [smem:[#allocation8 + $0x22]]
    %s157 = sld [smem:[#allocation8 + $0x23]]
    %s158 = sld [smem:[#allocation8 + $0x24]]
    %s159 = sld [smem:[#allocation8 + $0x25]]
    %s160 = sld [smem:[#allocation8 + $0x26]]
    %s161 = sld [smem:[#allocation8 + $0x27]]
    %s162 = sld [smem:[#allocation8 + $0x28]]
    %s163 = sld [smem:[#allocation8 + $0x29]]
    %s164 = sld [smem:[#allocation8 + $0x2a]]
    %s165 = sld [smem:[#allocation8 + $0x2b]]
    %s166 = sld [smem:[#allocation8 + $0x2c]]
    %s167 = sld [smem:[#allocation8 + $0x2d]]
    %s168 = sld [smem:[#allocation8 + $0x2e]]
    %s169 = sld [smem:[#allocation8 + $0x2f]]
    %s170 = sld [smem:[#allocation8 + $0x30]]
    %s171 = sld [smem:[#allocation8 + $0x31]]
    %s172 = sld [smem:[#allocation8 + $0x32]]
    %s173 = sld [smem:[#allocation8 + $0x33]]
    %s174 = sld [smem:[#allocation8 + $0x34]]
    %s175 = sld [smem:[#allocation8 + $0x35]]
    %s176 = sld [smem:[#allocation8 + $0x36]]
    %s177 = sld [smem:[#allocation8 + $0x37]]
    %s178 = sld [smem:[#allocation8 + $0x38]]
    %s179 = sld [smem:[#allocation8 + $0x39]]
    %s180 = sld [smem:[#allocation8 + $0x3a]]
    %s181 = sld [smem:[#allocation8 + $0x3b]]
    %s182 = sld [smem:[#allocation8 + $0x3c]]
    %s183 = sld [smem:[#allocation8 + $0x3d]]
    %s184 = sld [smem:[#allocation8 + $0x3e]]
    %s185 = sld [smem:[#allocation8 + $0x3f]]
    %s186 = sld [smem:[#allocation2]]
    %v187 = vstv %s186
    %v188 = vld [vmem:[#allocation3] sm:$0xff]
    %v189 = vld [vmem:[#allocation3 + $0x8] sm:$0xff]
    %v190 = vld [vmem:[#allocation3 + $0x10] sm:$0xff]
    %v191 = vld [vmem:[#allocation3 + $0x18] sm:$0xff]
    %v192 = vstv %s58
    %v193 = vmul.f32 %v188, %v192
    %v194 = vmul.f32 %v189, %v192
    %v195 = vmul.f32 %v190, %v192
    %v196 = vmul.f32 %v191, %v192
    %v197 = vstv %s122
    %v198 = vadd.f32 %v193, %v197
    %v199 = vadd.f32 %v194, %v197
    %v200 = vadd.f32 %v195, %v197
    %v201 = vadd.f32 %v196, %v197
    %v202 = vmax.f32 %v198, 0.0
    %v203 = vmax.f32 %v199, 0.0
    %v204 = vmax.f32 %v200, 0.0
    %v205 = vmax.f32 %v201, 0.0
    %v206 = vadd.f32 %v187, %v202
    %v207 = vadd.f32 %v187, %v203
    %v208 = vadd.f32 %v187, %v204
    %v209 = vadd.f32 %v187, %v205
    %v210 = vstv %s59
    %v211 = vmul.f32 %v188, %v210
    %v212 = vmul.f32 %v189, %v210
    %v213 = vmul.f32 %v190, %v210
    %v214 = vmul.f32 %v191, %v210
    %v215 = vstv %s123
    %v216 = vadd.f32 %v211, %v215
    %v217 = vadd.f32 %v212, %v215
    %v218 = vadd.f32 %v213, %v215
    %v219 = vadd.f32 %v214, %v215
    %v220 = vmax.f32 %v216, 0.0
    %v221 = vmax.f32 %v217, 0.0
    %v222 = vmax.f32 %v218, 0.0
    %v223 = vmax.f32 %v219, 0.0
    %v224 = vadd.f32 %v220, 0.0
    %v225 = vadd.f32 %v221, 0.0
    %v226 = vadd.f32 %v222, 0.0
    %v227 = vadd.f32 %v223, 0.0
    %v228 = vstv %s60
    %v229 = vmul.f32 %v188, %v228
    %v230 = vmul.f32 %v189, %v228
    %v231 = vmul.f32 %v190, %v228
    %v232 = vmul.f32 %v191, %v228
    %v233 = vstv %s124
    %v234 = vadd.f32 %v229, %v233
    %v235 = vadd.f32 %v230, %v233
    %v236 = vadd.f32 %v231, %v233
    %v237 = vadd.f32 %v232, %v233
    %v238 = vmax.f32 %v234, 0.0
    %v239 = vmax.f32 %v235, 0.0
    %v240 = vmax.f32 %v236, 0.0
    %v241 = vmax.f32 %v237, 0.0
    %v242 = vadd.f32 %v206, %v238
    %v243 = vadd.f32 %v207, %v239
    %v244 = vadd.f32 %v208, %v240
    %v245 = vadd.f32 %v209, %v241
    %v246 = vstv %s61
    %v247 = vmul.f32 %v188, %v246
    %v248 = vmul.f32 %v189, %v246
    %v249 = vmul.f32 %v190, %v246
    %v250 = vmul.f32 %v191, %v246
    %v251 = vstv %s125
    %v252 = vadd.f32 %v247, %v251
    %v253 = vadd.f32 %v248, %v251
    %v254 = vadd.f32 %v249, %v251
    %v255 = vadd.f32 %v250, %v251
    %v256 = vmax.f32 %v252, 0.0
    %v257 = vmax.f32 %v253, 0.0
    %v258 = vmax.f32 %v254, 0.0
    %v259 = vmax.f32 %v255, 0.0
    %v260 = vadd.f32 %v224, %v256
    %v261 = vadd.f32 %v225, %v257
    %v262 = vadd.f32 %v226, %v258
    %v263 = vadd.f32 %v227, %v259
    %v264 = vstv %s62
    %v265 = vmul.f32 %v188, %v264
    %v266 = vmul.f32 %v189, %v264
    %v267 = vmul.f32 %v190, %v264
    %v268 = vmul.f32 %v191, %v264
    %v269 = vstv %s126
    %v270 = vadd.f32 %v265, %v269
    %v271 = vadd.f32 %v266, %v269
    %v272 = vadd.f32 %v267, %v269
    %v273 = vadd.f32 %v268, %v269
    %v274 = vmax.f32 %v270, 0.0
    %v275 = vmax.f32 %v271, 0.0
    %v276 = vmax.f32 %v272, 0.0
    %v277 = vmax.f32 %v273, 0.0
    %v278 = vadd.f32 %v242, %v274
    %v279 = vadd.f32 %v243, %v275
    %v280 = vadd.f32 %v244, %v276
    %v281 = vadd.f32 %v245, %v277
    %v282 = vstv %s63
    %v283 = vmul.f32 %v188, %v282
    %v284 = vmul.f32 %v189, %v282
    %v285 = vmul.f32 %v190, %v282
    %v286 = vmul.f32 %v191, %v282
    %v287 = vstv %s127
    %v288 = vadd.f32 %v283, %v287
    %v289 = vadd.f32 %v284, %v287
    %v290 = vadd.f32 %v285, %v287
    %v291 = vadd.f32 %v286, %v287
    %v292 = vmax.f32 %v288, 0.0
    %v293 = vmax.f32 %v289, 0.0
    %v294 = vmax.f32 %v290, 0.0
    %v295 = vmax.f32 %v291, 0.0
    %v296 = vadd.f32 %v260, %v292
    %v297 = vadd.f32 %v261, %v293
    %v298 = vadd.f32 %v262, %v294
    %v299 = vadd.f32 %v263, %v295
    %v300 = vstv %s64
    %v301 = vmul.f32 %v188, %v300
    %v302 = vmul.f32 %v189, %v300
    %v303 = vmul.f32 %v190, %v300
    %v304 = vmul.f32 %v191, %v300
    %v305 = vstv %s128
    %v306 = vadd.f32 %v301, %v305
    %v307 = vadd.f32 %v302, %v305
    %v308 = vadd.f32 %v303, %v305
    %v309 = vadd.f32 %v304, %v305
    %v310 = vmax.f32 %v306, 0.0
    %v311 = vmax.f32 %v307, 0.0
    %v312 = vmax.f32 %v308, 0.0
    %v313 = vmax.f32 %v309, 0.0
    %v314 = vadd.f32 %v278, %v310
    %v315 = vadd.f32 %v279, %v311
    %v316 = vadd.f32 %v280, %v312
    %v317 = vadd.f32 %v281, %v313
    %v318 = vstv %s65
    %v319 = vmul.f32 %v188, %v318
    %v320 = vmul.f32 %v189, %v318
    %v321 = vmul.f32 %v190, %v318
    %v322 = vmul.f32 %v191, %v318
    %v323 = vstv %s129
    %v324 = vadd.f32 %v319, %v323
    %v325 = vadd.f32 %v320, %v323
    %v326 = vadd.f32 %v321, %v323
    %v327 = vadd.f32 %v322, %v323
    %v328 = vmax.f32 %v324, 0.0
    %v329 = vmax.f32 %v325, 0.0
    %v330 = vmax.f32 %v326, 0.0
    %v331 = vmax.f32 %v327, 0.0
    %v332 = vadd.f32 %v296, %v328
    %v333 = vadd.f32 %v297, %v329
    %v334 = vadd.f32 %v298, %v330
    %v335 = vadd.f32 %v299, %v331
    %v336 = vstv %s66
    %v337 = vmul.f32 %v188, %v336
    %v338 = vmul.f32 %v189, %v336
    %v339 = vmul.f32 %v190, %v336
    %v340 = vmul.f32 %v191, %v336
    %v341 = vstv %s130
    %v342 = vadd.f32 %v337, %v341
    %v343 = vadd.f32 %v338, %v341
    %v344 = vadd.f32 %v339, %v341
    %v345 = vadd.f32 %v340, %v341
    %v346 = vmax.f32 %v342, 0.0
    %v347 = vmax.f32 %v343, 0.0
    %v348 = vmax.f32 %v344, 0.0
    %v349 = vmax.f32 %v345, 0.0
    %v350 = vadd.f32 %v314, %v346
    %v351 = vadd.f32 %v315, %v347
    %v352 = vadd.f32 %v316, %v348
    %v353 = vadd.f32 %v317, %v349
    %v354 = vstv %s67
    %v355 = vmul.f32 %v188, %v354
    %v356 = vmul.f32 %v189, %v354
    %v357 = vmul.f32 %v190, %v354
    %v358 = vmul.f32 %v191, %v354
    %v359 = vstv %s131
    %v360 = vadd.f32 %v355, %v359
    %v361 = vadd.f32 %v356, %v359
    %v362 = vadd.f32 %v357, %v359
    %v363 = vadd.f32 %v358, %v359
    %v364 = vmax.f32 %v360, 0.0
    %v365 = vmax.f32 %v361, 0.0
    %v366 = vmax.f32 %v362, 0.0
    %v367 = vmax.f32 %v363, 0.0
    %v368 = vadd.f32 %v332, %v364
    %v369 = vadd.f32 %v333, %v365
    %v370 = vadd.f32 %v334, %v366
    %v371 = vadd.f32 %v335, %v367
    %v372 = vstv %s68
    %v373 = vmul.f32 %v188, %v372
    %v374 = vmul.f32 %v189, %v372
    %v375 = vmul.f32 %v190, %v372
    %v376 = vmul.f32 %v191, %v372
    %v377 = vstv %s132
    %v378 = vadd.f32 %v373, %v377
    %v379 = vadd.f32 %v374, %v377
    %v380 = vadd.f32 %v375, %v377
    %v381 = vadd.f32 %v376, %v377
    %v382 = vmax.f32 %v378, 0.0
    %v383 = vmax.f32 %v379, 0.0
    %v384 = vmax.f32 %v380, 0.0
    %v385 = vmax.f32 %v381, 0.0
    %v386 = vadd.f32 %v350, %v382
    %v387 = vadd.f32 %v351, %v383
    %v388 = vadd.f32 %v352, %v384
    %v389 = vadd.f32 %v353, %v385
    %v390 = vstv %s69
    %v391 = vmul.f32 %v188, %v390
    %v392 = vmul.f32 %v189, %v390
    %v393 = vmul.f32 %v190, %v390
    %v394 = vmul.f32 %v191, %v390
    %v395 = vstv %s133
    %v396 = vadd.f32 %v391, %v395
    %v397 = vadd.f32 %v392, %v395
    %v398 = vadd.f32 %v393, %v395
    %v399 = vadd.f32 %v394, %v395
    %v400 = vmax.f32 %v396, 0.0
    %v401 = vmax.f32 %v397, 0.0
    %v402 = vmax.f32 %v398, 0.0
    %v403 = vmax.f32 %v399, 0.0
    %v404 = vadd.f32 %v368, %v400
    %v405 = vadd.f32 %v369, %v401
    %v406 = vadd.f32 %v370, %v402
    %v407 = vadd.f32 %v371, %v403
    %v408 = vstv %s70
    %v409 = vmul.f32 %v188, %v408
    %v410 = vmul.f32 %v189, %v408
    %v411 = vmul.f32 %v190, %v408
    %v412 = vmul.f32 %v191, %v408
    %v413 = vstv %s134
    %v414 = vadd.f32 %v409, %v413
    %v415 = vadd.f32 %v410, %v413
    %v416 = vadd.f32 %v411, %v413
    %v417 = vadd.f32 %v412, %v413
    %v418 = vmax.f32 %v414, 0.0
    %v419 = vmax.f32 %v415, 0.0
    %v420 = vmax.f32 %v416, 0.0
    %v421 = vmax.f32 %v417, 0.0
    %v422 = vadd.f32 %v386, %v418
    %v423 = vadd.f32 %v387, %v419
    %v424 = vadd.f32 %v388, %v420
    %v425 = vadd.f32 %v389, %v421
    %v426 = vstv %s71
    %v427 = vmul.f32 %v188, %v426
    %v428 = vmul.f32 %v189, %v426
    %v429 = vmul.f32 %v190, %v426
    %v430 = vmul.f32 %v191, %v426
    %v431 = vstv %s135
    %v432 = vadd.f32 %v427, %v431
    %v433 = vadd.f32 %v428, %v431
    %v434 = vadd.f32 %v429, %v431
    %v435 = vadd.f32 %v430, %v431
    %v436 = vmax.f32 %v432, 0.0
    %v437 = vmax.f32 %v433, 0.0
    %v438 = vmax.f32 %v434, 0.0
    %v439 = vmax.f32 %v435, 0.0
    %v440 = vadd.f32 %v404, %v436
    %v441 = vadd.f32 %v405, %v437
    %v442 = vadd.f32 %v406, %v438
    %v443 = vadd.f32 %v407, %v439
    %v444 = vstv %s72
    %v445 = vmul.f32 %v188, %v444
    %v446 = vmul.f32 %v189, %v444
    %v447 = vmul.f32 %v190, %v444
    %v448 = vmul.f32 %v191, %v444
    %v449 = vstv %s136
    %v450 = vadd.f32 %v445, %v449
    %v451 = vadd.f32 %v446, %v449
    %v452 = vadd.f32 %v447, %v449
    %v453 = vadd.f32 %v448, %v449
    %v454 = vmax.f32 %v450, 0.0
    %v455 = vmax.f32 %v451, 0.0
    %v456 = vmax.f32 %v452, 0.0
    %v457 = vmax.f32 %v453, 0.0
    %v458 = vadd.f32 %v422, %v454
    %v459 = vadd.f32 %v423, %v455
    %v460 = vadd.f32 %v424, %v456
    %v461 = vadd.f32 %v425, %v457
    %v462 = vstv %s73
    %v463 = vmul.f32 %v188, %v462
    %v464 = vmul.f32 %v189, %v462
    %v465 = vmul.f32 %v190, %v462
    %v466 = vmul.f32 %v191, %v462
    %v467 = vstv %s137
    %v468 = vadd.f32 %v463, %v467
    %v469 = vadd.f32 %v464, %v467
    %v470 = vadd.f32 %v465, %v467
    %v471 = vadd.f32 %v466, %v467
    %v472 = vmax.f32 %v468, 0.0
    %v473 = vmax.f32 %v469, 0.0
    %v474 = vmax.f32 %v470, 0.0
    %v475 = vmax.f32 %v471, 0.0
    %v476 = vadd.f32 %v440, %v472
    %v477 = vadd.f32 %v441, %v473
    %v478 = vadd.f32 %v442, %v474
    %v479 = vadd.f32 %v443, %v475
    %v480 = vstv %s74
    %v481 = vmul.f32 %v188, %v480
    %v482 = vmul.f32 %v189, %v480
    %v483 = vmul.f32 %v190, %v480
    %v484 = vmul.f32 %v191, %v480
    %v485 = vstv %s138
    %v486 = vadd.f32 %v481, %v485
    %v487 = vadd.f32 %v482, %v485
    %v488 = vadd.f32 %v483, %v485
    %v489 = vadd.f32 %v484, %v485
    %v490 = vmax.f32 %v486, 0.0
    %v491 = vmax.f32 %v487, 0.0
    %v492 = vmax.f32 %v488, 0.0
    %v493 = vmax.f32 %v489, 0.0
    %v494 = vadd.f32 %v458, %v490
    %v495 = vadd.f32 %v459, %v491
    %v496 = vadd.f32 %v460, %v492
    %v497 = vadd.f32 %v461, %v493
    %v498 = vstv %s75
    %v499 = vmul.f32 %v188, %v498
    %v500 = vmul.f32 %v189, %v498
    %v501 = vmul.f32 %v190, %v498
    %v502 = vmul.f32 %v191, %v498
    %v503 = vstv %s139
    %v504 = vadd.f32 %v499, %v503
    %v505 = vadd.f32 %v500, %v503
    %v506 = vadd.f32 %v501, %v503
    %v507 = vadd.f32 %v502, %v503
    %v508 = vmax.f32 %v504, 0.0
    %v509 = vmax.f32 %v505, 0.0
    %v510 = vmax.f32 %v506, 0.0
    %v511 = vmax.f32 %v507, 0.0
    %v512 = vadd.f32 %v476, %v508
    %v513 = vadd.f32 %v477, %v509
    %v514 = vadd.f32 %v478, %v510
    %v515 = vadd.f32 %v479, %v511
    %v516 = vstv %s76
    %v517 = vmul.f32 %v188, %v516
    %v518 = vmul.f32 %v189, %v516
    %v519 = vmul.f32 %v190, %v516
    %v520 = vmul.f32 %v191, %v516
    %v521 = vstv %s140
    %v522 = vadd.f32 %v517, %v521
    %v523 = vadd.f32 %v518, %v521
    %v524 = vadd.f32 %v519, %v521
    %v525 = vadd.f32 %v520, %v521
    %v526 = vmax.f32 %v522, 0.0
    %v527 = vmax.f32 %v523, 0.0
    %v528 = vmax.f32 %v524, 0.0
    %v529 = vmax.f32 %v525, 0.0
    %v530 = vadd.f32 %v494, %v526
    %v531 = vadd.f32 %v495, %v527
    %v532 = vadd.f32 %v496, %v528
    %v533 = vadd.f32 %v497, %v529
    %v534 = vstv %s77
    %v535 = vmul.f32 %v188, %v534
    %v536 = vmul.f32 %v189, %v534
    %v537 = vmul.f32 %v190, %v534
    %v538 = vmul.f32 %v191, %v534
    %v539 = vstv %s141
    %v540 = vadd.f32 %v535, %v539
    %v541 = vadd.f32 %v536, %v539
    %v542 = vadd.f32 %v537, %v539
    %v543 = vadd.f32 %v538, %v539
    %v544 = vmax.f32 %v540, 0.0
    %v545 = vmax.f32 %v541, 0.0
    %v546 = vmax.f32 %v542, 0.0
    %v547 = vmax.f32 %v543, 0.0
    %v548 = vadd.f32 %v512, %v544
    %v549 = vadd.f32 %v513, %v545
    %v550 = vadd.f32 %v514, %v546
    %v551 = vadd.f32 %v515, %v547
    %v552 = vstv %s78
    %v553 = vmul.f32 %v188, %v552
    %v554 = vmul.f32 %v189, %v552
    %v555 = vmul.f32 %v190, %v552
    %v556 = vmul.f32 %v191, %v552
    %v557 = vstv %s142
    %v558 = vadd.f32 %v553, %v557
    %v559 = vadd.f32 %v554, %v557
    %v560 = vadd.f32 %v555, %v557
    %v561 = vadd.f32 %v556, %v557
    %v562 = vmax.f32 %v558, 0.0
    %v563 = vmax.f32 %v559, 0.0
    %v564 = vmax.f32 %v560, 0.0
    %v565 = vmax.f32 %v561, 0.0
    %v566 = vadd.f32 %v530, %v562
    %v567 = vadd.f32 %v531, %v563
    %v568 = vadd.f32 %v532, %v564
    %v569 = vadd.f32 %v533, %v565
    %v570 = vstv %s79
    %v571 = vmul.f32 %v188, %v570
    %v572 = vmul.f32 %v189, %v570
    %v573 = vmul.f32 %v190, %v570
    %v574 = vmul.f32 %v191, %v570
    %v575 = vstv %s143
    %v576 = vadd.f32 %v571, %v575
    %v577 = vadd.f32 %v572, %v575
    %v578 = vadd.f32 %v573, %v575
    %v579 = vadd.f32 %v574, %v575
    %v580 = vmax.f32 %v576, 0.0
    %v581 = vmax.f32 %v577, 0.0
    %v582 = vmax.f32 %v578, 0.0
    %v583 = vmax.f32 %v579, 0.0
    %v584 = vadd.f32 %v548, %v580
    %v585 = vadd.f32 %v549, %v581
    %v586 = vadd.f32 %v550, %v582
    %v587 = vadd.f32 %v551, %v583
    %v588 = vstv %s80
    %v589 = vmul.f32 %v188, %v588
    %v590 = vmul.f32 %v189, %v588
    %v591 = vmul.f32 %v190, %v588
    %v592 = vmul.f32 %v191, %v588
    %v593 = vstv %s144
    %v594 = vadd.f32 %v589, %v593
    %v595 = vadd.f32 %v590, %v593
    %v596 = vadd.f32 %v591, %v593
    %v597 = vadd.f32 %v592, %v593
    %v598 = vmax.f32 %v594, 0.0
    %v599 = vmax.f32 %v595, 0.0
    %v600 = vmax.f32 %v596, 0.0
    %v601 = vmax.f32 %v597, 0.0
    %v602 = vadd.f32 %v566, %v598
    %v603 = vadd.f32 %v567, %v599
    %v604 = vadd.f32 %v568, %v600
    %v605 = vadd.f32 %v569, %v601
    %v606 = vstv %s81
    %v607 = vmul.f32 %v188, %v606
    %v608 = vmul.f32 %v189, %v606
    %v609 = vmul.f32 %v190, %v606
    %v610 = vmul.f32 %v191, %v606
    %v611 = vstv %s145
    %v612 = vadd.f32 %v607, %v611
    %v613 = vadd.f32 %v608, %v611
    %v614 = vadd.f32 %v609, %v611
    %v615 = vadd.f32 %v610, %v611
    %v616 = vmax.f32 %v612, 0.0
    %v617 = vmax.f32 %v613, 0.0
    %v618 = vmax.f32 %v614, 0.0
    %v619 = vmax.f32 %v615, 0.0
    %v620 = vadd.f32 %v584, %v616
    %v621 = vadd.f32 %v585, %v617
    %v622 = vadd.f32 %v586, %v618
    %v623 = vadd.f32 %v587, %v619
    %v624 = vstv %s82
    %v625 = vmul.f32 %v188, %v624
    %v626 = vmul.f32 %v189, %v624
    %v627 = vmul.f32 %v190, %v624
    %v628 = vmul.f32 %v191, %v624
    %v629 = vstv %s146
    %v630 = vadd.f32 %v625, %v629
    %v631 = vadd.f32 %v626, %v629
    %v632 = vadd.f32 %v627, %v629
    %v633 = vadd.f32 %v628, %v629
    %v634 = vmax.f32 %v630, 0.0
    %v635 = vmax.f32 %v631, 0.0
    %v636 = vmax.f32 %v632, 0.0
    %v637 = vmax.f32 %v633, 0.0
    %v638 = vadd.f32 %v602, %v634
    %v639 = vadd.f32 %v603, %v635
    %v640 = vadd.f32 %v604, %v636
    %v641 = vadd.f32 %v605, %v637
    %v642 = vstv %s83
    %v643 = vmul.f32 %v188, %v642
    %v644 = vmul.f32 %v189, %v642
    %v645 = vmul.f32 %v190, %v642
    %v646 = vmul.f32 %v191, %v642
    %v647 = vstv %s147
    %v648 = vadd.f32 %v643, %v647
    %v649 = vadd.f32 %v644, %v647
    %v650 = vadd.f32 %v645, %v647
    %v651 = vadd.f32 %v646, %v647
    %v652 = vmax.f32 %v648, 0.0
    %v653 = vmax.f32 %v649, 0.0
    %v654 = vmax.f32 %v650, 0.0
    %v655 = vmax.f32 %v651, 0.0
    %v656 = vadd.f32 %v620, %v652
    %v657 = vadd.f32 %v621, %v653
    %v658 = vadd.f32 %v622, %v654
    %v659 = vadd.f32 %v623, %v655
    %v660 = vstv %s84
    %v661 = vmul.f32 %v188, %v660
    %v662 = vmul.f32 %v189, %v660
    %v663 = vmul.f32 %v190, %v660
    %v664 = vmul.f32 %v191, %v660
    %v665 = vstv %s148
    %v666 = vadd.f32 %v661, %v665
    %v667 = vadd.f32 %v662, %v665
    %v668 = vadd.f32 %v663, %v665
    %v669 = vadd.f32 %v664, %v665
    %v670 = vmax.f32 %v666, 0.0
    %v671 = vmax.f32 %v667, 0.0
    %v672 = vmax.f32 %v668, 0.0
    %v673 = vmax.f32 %v669, 0.0
    %v674 = vadd.f32 %v638, %v670
    %v675 = vadd.f32 %v639, %v671
    %v676 = vadd.f32 %v640, %v672
    %v677 = vadd.f32 %v641, %v673
    %v678 = vstv %s85
    %v679 = vmul.f32 %v188, %v678
    %v680 = vmul.f32 %v189, %v678
    %v681 = vmul.f32 %v190, %v678
    %v682 = vmul.f32 %v191, %v678
    %v683 = vstv %s149
    %v684 = vadd.f32 %v679, %v683
    %v685 = vadd.f32 %v680, %v683
    %v686 = vadd.f32 %v681, %v683
    %v687 = vadd.f32 %v682, %v683
    %v688 = vmax.f32 %v684, 0.0
    %v689 = vmax.f32 %v685, 0.0
    %v690 = vmax.f32 %v686, 0.0
    %v691 = vmax.f32 %v687, 0.0
    %v692 = vadd.f32 %v656, %v688
    %v693 = vadd.f32 %v657, %v689
    %v694 = vadd.f32 %v658, %v690
    %v695 = vadd.f32 %v659, %v691
    %v696 = vstv %s86
    %v697 = vmul.f32 %v188, %v696
    %v698 = vmul.f32 %v189, %v696
    %v699 = vmul.f32 %v190, %v696
    %v700 = vmul.f32 %v191, %v696
    %v701 = vstv %s150
    %v702 = vadd.f32 %v697, %v701
    %v703 = vadd.f32 %v698, %v701
    %v704 = vadd.f32 %v699, %v701
    %v705 = vadd.f32 %v700, %v701
    %v706 = vmax.f32 %v702, 0.0
    %v707 = vmax.f32 %v703, 0.0
    %v708 = vmax.f32 %v704, 0.0
    %v709 = vmax.f32 %v705, 0.0
    %v710 = vadd.f32 %v674, %v706
    %v711 = vadd.f32 %v675, %v707
    %v712 = vadd.f32 %v676, %v708
    %v713 = vadd.f32 %v677, %v709
    %v714 = vstv %s87
    %v715 = vmul.f32 %v188, %v714
    %v716 = vmul.f32 %v189, %v714
    %v717 = vmul.f32 %v190, %v714
    %v718 = vmul.f32 %v191, %v714
    %v719 = vstv %s151
    %v720 = vadd.f32 %v715, %v719
    %v721 = vadd.f32 %v716, %v719
    %v722 = vadd.f32 %v717, %v719
    %v723 = vadd.f32 %v718, %v719
    %v724 = vmin.f32 %v720, 0.0
    %v725 = vmin.f32 %v721, 0.0
    %v726 = vmin.f32 %v722, 0.0
    %v727 = vmin.f32 %v723, 0.0
    %v728 = vadd.f32 %v692, %v724
    %v729 = vadd.f32 %v693, %v725
    %v730 = vadd.f32 %v694, %v726
    %v731 = vadd.f32 %v695, %v727
    %v732 = vstv %s88
    %v733 = vmul.f32 %v188, %v732
    %v734 = vmul.f32 %v189, %v732
    %v735 = vmul.f32 %v190, %v732
    %v736 = vmul.f32 %v191, %v732
    %v737 = vstv %s152
    %v738 = vadd.f32 %v733, %v737
    %v739 = vadd.f32 %v734, %v737
    %v740 = vadd.f32 %v735, %v737
    %v741 = vadd.f32 %v736, %v737
    %v742 = vmin.f32 %v738, 0.0
    %v743 = vmin.f32 %v739, 0.0
    %v744 = vmin.f32 %v740, 0.0
    %v745 = vmin.f32 %v741, 0.0
    %v746 = vadd.f32 %v710, %v742
    %v747 = vadd.f32 %v711, %v743
    %v748 = vadd.f32 %v712, %v744
    %v749 = vadd.f32 %v713, %v745
    %v750 = vstv %s89
    %v751 = vmul.f32 %v188, %v750
    %v752 = vmul.f32 %v189, %v750
    %v753 = vmul.f32 %v190, %v750
    %v754 = vmul.f32 %v191, %v750
    %v755 = vstv %s153
    %v756 = vadd.f32 %v751, %v755
    %v757 = vadd.f32 %v752, %v755
    %v758 = vadd.f32 %v753, %v755
    %v759 = vadd.f32 %v754, %v755
    %v760 = vmin.f32 %v756, 0.0
    %v761 = vmin.f32 %v757, 0.0
    %v762 = vmin.f32 %v758, 0.0
    %v763 = vmin.f32 %v759, 0.0
    %v764 = vadd.f32 %v728, %v760
    %v765 = vadd.f32 %v729, %v761
    %v766 = vadd.f32 %v730, %v762
    %v767 = vadd.f32 %v731, %v763
    %v768 = vstv %s90
    %v769 = vmul.f32 %v188, %v768
    %v770 = vmul.f32 %v189, %v768
    %v771 = vmul.f32 %v190, %v768
    %v772 = vmul.f32 %v191, %v768
    %v773 = vstv %s154
    %v774 = vadd.f32 %v769, %v773
    %v775 = vadd.f32 %v770, %v773
    %v776 = vadd.f32 %v771, %v773
    %v777 = vadd.f32 %v772, %v773
    %v778 = vmin.f32 %v774, 0.0
    %v779 = vmin.f32 %v775, 0.0
    %v780 = vmin.f32 %v776, 0.0
    %v781 = vmin.f32 %v777, 0.0
    %v782 = vadd.f32 %v746, %v778
    %v783 = vadd.f32 %v747, %v779
    %v784 = vadd.f32 %v748, %v780
    %v785 = vadd.f32 %v749, %v781
    %v786 = vstv %s91
    %v787 = vmul.f32 %v188, %v786
    %v788 = vmul.f32 %v189, %v786
    %v789 = vmul.f32 %v190, %v786
    %v790 = vmul.f32 %v191, %v786
    %v791 = vstv %s155
    %v792 = vadd.f32 %v787, %v791
    %v793 = vadd.f32 %v788, %v791
    %v794 = vadd.f32 %v789, %v791
    %v795 = vadd.f32 %v790, %v791
    %v796 = vmin.f32 %v792, 0.0
    %v797 = vmin.f32 %v793, 0.0
    %v798 = vmin.f32 %v794, 0.0
    %v799 = vmin.f32 %v795, 0.0
    %v800 = vadd.f32 %v764, %v796
    %v801 = vadd.f32 %v765, %v797
    %v802 = vadd.f32 %v766, %v798
    %v803 = vadd.f32 %v767, %v799
    %v804 = vstv %s92
    %v805 = vmul.f32 %v188, %v804
    %v806 = vmul.f32 %v189, %v804
    %v807 = vmul.f32 %v190, %v804
    %v808 = vmul.f32 %v191, %v804
    %v809 = vstv %s156
    %v810 = vadd.f32 %v805, %v809
    %v811 = vadd.f32 %v806, %v809
    %v812 = vadd.f32 %v807, %v809
    %v813 = vadd.f32 %v808, %v809
    %v814 = vmin.f32 %v810, 0.0
    %v815 = vmin.f32 %v811, 0.0
    %v816 = vmin.f32 %v812, 0.0
    %v817 = vmin.f32 %v813, 0.0
    %v818 = vadd.f32 %v782, %v814
    %v819 = vadd.f32 %v783, %v815
    %v820 = vadd.f32 %v784, %v816
    %v821 = vadd.f32 %v785, %v817
    %v822 = vstv %s93
    %v823 = vmul.f32 %v188, %v822
    %v824 = vmul.f32 %v189, %v822
    %v825 = vmul.f32 %v190, %v822
    %v826 = vmul.f32 %v191, %v822
    %v827 = vstv %s157
    %v828 = vadd.f32 %v823, %v827
    %v829 = vadd.f32 %v824, %v827
    %v830 = vadd.f32 %v825, %v827
    %v831 = vadd.f32 %v826, %v827
    %v832 = vmin.f32 %v828, 0.0
    %v833 = vmin.f32 %v829, 0.0
    %v834 = vmin.f32 %v830, 0.0
    %v835 = vmin.f32 %v831, 0.0
    %v836 = vadd.f32 %v800, %v832
    %v837 = vadd.f32 %v801, %v833
    %v838 = vadd.f32 %v802, %v834
    %v839 = vadd.f32 %v803, %v835
    %v840 = vstv %s94
    %v841 = vmul.f32 %v188, %v840
    %v842 = vmul.f32 %v189, %v840
    %v843 = vmul.f32 %v190, %v840
    %v844 = vmul.f32 %v191, %v840
    %v845 = vstv %s158
    %v846 = vadd.f32 %v841, %v845
    %v847 = vadd.f32 %v842, %v845
    %v848 = vadd.f32 %v843, %v845
    %v849 = vadd.f32 %v844, %v845
    %v850 = vmin.f32 %v846, 0.0
    %v851 = vmin.f32 %v847, 0.0
    %v852 = vmin.f32 %v848, 0.0
    %v853 = vmin.f32 %v849, 0.0
    %v854 = vadd.f32 %v818, %v850
    %v855 = vadd.f32 %v819, %v851
    %v856 = vadd.f32 %v820, %v852
    %v857 = vadd.f32 %v821, %v853
    %v858 = vstv %s95
    %v859 = vmul.f32 %v188, %v858
    %v860 = vmul.f32 %v189, %v858
    %v861 = vmul.f32 %v190, %v858
    %v862 = vmul.f32 %v191, %v858
    %v863 = vstv %s159
    %v864 = vadd.f32 %v859, %v863
    %v865 = vadd.f32 %v860, %v863
    %v866 = vadd.f32 %v861, %v863
    %v867 = vadd.f32 %v862, %v863
    %v868 = vmin.f32 %v864, 0.0
    %v869 = vmin.f32 %v865, 0.0
    %v870 = vmin.f32 %v866, 0.0
    %v871 = vmin.f32 %v867, 0.0
    %v872 = vadd.f32 %v836, %v868
    %v873 = vadd.f32 %v837, %v869
    %v874 = vadd.f32 %v838, %v870
    %v875 = vadd.f32 %v839, %v871
    %v876 = vstv %s96
    %v877 = vmul.f32 %v188, %v876
    %v878 = vmul.f32 %v189, %v876
    %v879 = vmul.f32 %v190, %v876
    %v880 = vmul.f32 %v191, %v876
    %v881 = vstv %s160
    %v882 = vadd.f32 %v877, %v881
    %v883 = vadd.f32 %v878, %v881
    %v884 = vadd.f32 %v879, %v881
    %v885 = vadd.f32 %v880, %v881
    %v886 = vmin.f32 %v882, 0.0
    %v887 = vmin.f32 %v883, 0.0
    %v888 = vmin.f32 %v884, 0.0
    %v889 = vmin.f32 %v885, 0.0
    %v890 = vadd.f32 %v854, %v886
    %v891 = vadd.f32 %v855, %v887
    %v892 = vadd.f32 %v856, %v888
    %v893 = vadd.f32 %v857, %v889
    %v894 = vstv %s97
    %v895 = vmul.f32 %v188, %v894
    %v896 = vmul.f32 %v189, %v894
    %v897 = vmul.f32 %v190, %v894
    %v898 = vmul.f32 %v191, %v894
    %v899 = vstv %s161
    %v900 = vadd.f32 %v895, %v899
    %v901 = vadd.f32 %v896, %v899
    %v902 = vadd.f32 %v897, %v899
    %v903 = vadd.f32 %v898, %v899
    %v904 = vmin.f32 %v900, 0.0
    %v905 = vmin.f32 %v901, 0.0
    %v906 = vmin.f32 %v902, 0.0
    %v907 = vmin.f32 %v903, 0.0
    %v908 = vadd.f32 %v872, %v904
    %v909 = vadd.f32 %v873, %v905
    %v910 = vadd.f32 %v874, %v906
    %v911 = vadd.f32 %v875, %v907
    %v912 = vstv %s98
    %v913 = vmul.f32 %v188, %v912
    %v914 = vmul.f32 %v189, %v912
    %v915 = vmul.f32 %v190, %v912
    %v916 = vmul.f32 %v191, %v912
    %v917 = vstv %s162
    %v918 = vadd.f32 %v913, %v917
    %v919 = vadd.f32 %v914, %v917
    %v920 = vadd.f32 %v915, %v917
    %v921 = vadd.f32 %v916, %v917
    %v922 = vmin.f32 %v918, 0.0
    %v923 = vmin.f32 %v919, 0.0
    %v924 = vmin.f32 %v920, 0.0
    %v925 = vmin.f32 %v921, 0.0
    %v926 = vadd.f32 %v890, %v922
    %v927 = vadd.f32 %v891, %v923
    %v928 = vadd.f32 %v892, %v924
    %v929 = vadd.f32 %v893, %v925
    %v930 = vstv %s99
    %v931 = vmul.f32 %v188, %v930
    %v932 = vmul.f32 %v189, %v930
    %v933 = vmul.f32 %v190, %v930
    %v934 = vmul.f32 %v191, %v930
    %v935 = vstv %s163
    %v936 = vadd.f32 %v931, %v935
    %v937 = vadd.f32 %v932, %v935
    %v938 = vadd.f32 %v933, %v935
    %v939 = vadd.f32 %v934, %v935
    %v940 = vmin.f32 %v936, 0.0
    %v941 = vmin.f32 %v937, 0.0
    %v942 = vmin.f32 %v938, 0.0
    %v943 = vmin.f32 %v939, 0.0
    %v944 = vadd.f32 %v908, %v940
    %v945 = vadd.f32 %v909, %v941
    %v946 = vadd.f32 %v910, %v942
    %v947 = vadd.f32 %v911, %v943
    %v948 = vstv %s100
    %v949 = vmul.f32 %v188, %v948
    %v950 = vmul.f32 %v189, %v948
    %v951 = vmul.f32 %v190, %v948
    %v952 = vmul.f32 %v191, %v948
    %v953 = vstv %s164
    %v954 = vadd.f32 %v949, %v953
    %v955 = vadd.f32 %v950, %v953
    %v956 = vadd.f32 %v951, %v953
    %v957 = vadd.f32 %v952, %v953
    %v958 = vmin.f32 %v954, 0.0
    %v959 = vmin.f32 %v955, 0.0
    %v960 = vmin.f32 %v956, 0.0
    %v961 = vmin.f32 %v957, 0.0
    %v962 = vadd.f32 %v926, %v958
    %v963 = vadd.f32 %v927, %v959
    %v964 = vadd.f32 %v928, %v960
    %v965 = vadd.f32 %v929, %v961
    %v966 = vstv %s101
    %v967 = vmul.f32 %v188, %v966
    %v968 = vmul.f32 %v189, %v966
    %v969 = vmul.f32 %v190, %v966
    %v970 = vmul.f32 %v191, %v966
    %v971 = vstv %s165
    %v972 = vadd.f32 %v967, %v971
    %v973 = vadd.f32 %v968, %v971
    %v974 = vadd.f32 %v969, %v971
    %v975 = vadd.f32 %v970, %v971
    %v976 = vmin.f32 %v972, 0.0
    %v977 = vmin.f32 %v973, 0.0
    %v978 = vmin.f32 %v974, 0.0
    %v979 = vmin.f32 %v975, 0.0
    %v980 = vadd.f32 %v944, %v976
    %v981 = vadd.f32 %v945, %v977
    %v982 = vadd.f32 %v946, %v978
    %v983 = vadd.f32 %v947, %v979
    %v984 = vstv %s102
    %v985 = vmul.f32 %v188, %v984
    %v986 = vmul.f32 %v189, %v984
    %v987 = vmul.f32 %v190, %v984
    %v988 = vmul.f32 %v191, %v984
    %v989 = vstv %s166
    %v990 = vadd.f32 %v985, %v989
    %v991 = vadd.f32 %v986, %v989
    %v992 = vadd.f32 %v987, %v989
    %v993 = vadd.f32 %v988, %v989
    %v994 = vmin.f32 %v990, 0.0
    %v995 = vmin.f32 %v991, 0.0
    %v996 = vmin.f32 %v992, 0.0
    %v997 = vmin.f32 %v993, 0.0
    %v998 = vadd.f32 %v962, %v994
    %v999 = vadd.f32 %v963, %v995
    %v1000 = vadd.f32 %v964, %v996
    %v1001 = vadd.f32 %v965, %v997
    %v1002 = vstv %s103
    %v1003 = vmul.f32 %v188, %v1002
    %v1004 = vmul.f32 %v189, %v1002
    %v1005 = vmul.f32 %v190, %v1002
    %v1006 = vmul.f32 %v191, %v1002
    %v1007 = vstv %s167
    %v1008 = vadd.f32 %v1003, %v1007
    %v1009 = vadd.f32 %v1004, %v1007
    %v1010 = vadd.f32 %v1005, %v1007
    %v1011 = vadd.f32 %v1006, %v1007
    %v1012 = vmin.f32 %v1008, 0.0
    %v1013 = vmin.f32 %v1009, 0.0
    %v1014 = vmin.f32 %v1010, 0.0
    %v1015 = vmin.f32 %v1011, 0.0
    %v1016 = vadd.f32 %v980, %v1012
    %v1017 = vadd.f32 %v981, %v1013
    %v1018 = vadd.f32 %v982, %v1014
    %v1019 = vadd.f32 %v983, %v1015
    %v1020 = vstv %s104
    %v1021 = vmul.f32 %v188, %v1020
    %v1022 = vmul.f32 %v189, %v1020
    %v1023 = vmul.f32 %v190, %v1020
    %v1024 = vmul.f32 %v191, %v1020
    %v1025 = vstv %s168
    %v1026 = vadd.f32 %v1021, %v1025
    %v1027 = vadd.f32 %v1022, %v1025
    %v1028 = vadd.f32 %v1023, %v1025
    %v1029 = vadd.f32 %v1024, %v1025
    %v1030 = vmin.f32 %v1026, 0.0
    %v1031 = vmin.f32 %v1027, 0.0
    %v1032 = vmin.f32 %v1028, 0.0
    %v1033 = vmin.f32 %v1029, 0.0
    %v1034 = vadd.f32 %v998, %v1030
    %v1035 = vadd.f32 %v999, %v1031
    %v1036 = vadd.f32 %v1000, %v1032
    %v1037 = vadd.f32 %v1001, %v1033
    %v1038 = vstv %s105
    %v1039 = vmul.f32 %v188, %v1038
    %v1040 = vmul.f32 %v189, %v1038
    %v1041 = vmul.f32 %v190, %v1038
    %v1042 = vmul.f32 %v191, %v1038
    %v1043 = vstv %s169
    %v1044 = vadd.f32 %v1039, %v1043
    %v1045 = vadd.f32 %v1040, %v1043
    %v1046 = vadd.f32 %v1041, %v1043
    %v1047 = vadd.f32 %v1042, %v1043
    %v1048 = vmin.f32 %v1044, 0.0
    %v1049 = vmin.f32 %v1045, 0.0
    %v1050 = vmin.f32 %v1046, 0.0
    %v1051 = vmin.f32 %v1047, 0.0
    %v1052 = vadd.f32 %v1016, %v1048
    %v1053 = vadd.f32 %v1017, %v1049
    %v1054 = vadd.f32 %v1018, %v1050
    %v1055 = vadd.f32 %v1019, %v1051
    %v1056 = vstv %s106
    %v1057 = vmul.f32 %v188, %v1056
    %v1058 = vmul.f32 %v189, %v1056
    %v1059 = vmul.f32 %v190, %v1056
    %v1060 = vmul.f32 %v191, %v1056
    %v1061 = vstv %s170
    %v1062 = vadd.f32 %v1057, %v1061
    %v1063 = vadd.f32 %v1058, %v1061
    %v1064 = vadd.f32 %v1059, %v1061
    %v1065 = vadd.f32 %v1060, %v1061
    %v1066 = vmin.f32 %v1062, 0.0
    %v1067 = vmin.f32 %v1063, 0.0
    %v1068 = vmin.f32 %v1064, 0.0
    %v1069 = vmin.f32 %v1065, 0.0
    %v1070 = vadd.f32 %v1034, %v1066
    %v1071 = vadd.f32 %v1035, %v1067
    %v1072 = vadd.f32 %v1036, %v1068
    %v1073 = vadd.f32 %v1037, %v1069
    %v1074 = vstv %s107
    %v1075 = vmul.f32 %v188, %v1074
    %v1076 = vmul.f32 %v189, %v1074
    %v1077 = vmul.f32 %v190, %v1074
    %v1078 = vmul.f32 %v191, %v1074
    %v1079 = vstv %s171
    %v1080 = vadd.f32 %v1075, %v1079
    %v1081 = vadd.f32 %v1076, %v1079
    %v1082 = vadd.f32 %v1077, %v1079
    %v1083 = vadd.f32 %v1078, %v1079
    %v1084 = vmin.f32 %v1080, 0.0
    %v1085 = vmin.f32 %v1081, 0.0
    %v1086 = vmin.f32 %v1082, 0.0
    %v1087 = vmin.f32 %v1083, 0.0
    %v1088 = vadd.f32 %v1052, %v1084
    %v1089 = vadd.f32 %v1053, %v1085
    %v1090 = vadd.f32 %v1054, %v1086
    %v1091 = vadd.f32 %v1055, %v1087
    %v1092 = vstv %s108
    %v1093 = vmul.f32 %v188, %v1092
    %v1094 = vmul.f32 %v189, %v1092
    %v1095 = vmul.f32 %v190, %v1092
    %v1096 = vmul.f32 %v191, %v1092
    %v1097 = vstv %s172
    %v1098 = vadd.f32 %v1093, %v1097
    %v1099 = vadd.f32 %v1094, %v1097
    %v1100 = vadd.f32 %v1095, %v1097
    %v1101 = vadd.f32 %v1096, %v1097
    %v1102 = vmin.f32 %v1098, 0.0
    %v1103 = vmin.f32 %v1099, 0.0
    %v1104 = vmin.f32 %v1100, 0.0
    %v1105 = vmin.f32 %v1101, 0.0
    %v1106 = vadd.f32 %v1070, %v1102
    %v1107 = vadd.f32 %v1071, %v1103
    %v1108 = vadd.f32 %v1072, %v1104
    %v1109 = vadd.f32 %v1073, %v1105
    %v1110 = vstv %s109
    %v1111 = vmul.f32 %v188, %v1110
    %v1112 = vmul.f32 %v189, %v1110
    %v1113 = vmul.f32 %v190, %v1110
    %v1114 = vmul.f32 %v191, %v1110
    %v1115 = vstv %s173
    %v1116 = vadd.f32 %v1111, %v1115
    %v1117 = vadd.f32 %v1112, %v1115
    %v1118 = vadd.f32 %v1113, %v1115
    %v1119 = vadd.f32 %v1114, %v1115
    %v1120 = vmin.f32 %v1116, 0.0
    %v1121 = vmin.f32 %v1117, 0.0
    %v1122 = vmin.f32 %v1118, 0.0
    %v1123 = vmin.f32 %v1119, 0.0
    %v1124 = vadd.f32 %v1088, %v1120
    %v1125 = vadd.f32 %v1089, %v1121
    %v1126 = vadd.f32 %v1090, %v1122
    %v1127 = vadd.f32 %v1091, %v1123
    %v1128 = vstv %s110
    %v1129 = vmul.f32 %v188, %v1128
    %v1130 = vmul.f32 %v189, %v1128
    %v1131 = vmul.f32 %v190, %v1128
    %v1132 = vmul.f32 %v191, %v1128
    %v1133 = vstv %s174
    %v1134 = vadd.f32 %v1129, %v1133
    %v1135 = vadd.f32 %v1130, %v1133
    %v1136 = vadd.f32 %v1131, %v1133
    %v1137 = vadd.f32 %v1132, %v1133
    %v1138 = vmin.f32 %v1134, 0.0
    %v1139 = vmin.f32 %v1135, 0.0
    %v1140 = vmin.f32 %v1136, 0.0
    %v1141 = vmin.f32 %v1137, 0.0
    %v1142 = vadd.f32 %v1106, %v1138
    %v1143 = vadd.f32 %v1107, %v1139
    %v1144 = vadd.f32 %v1108, %v1140
    %v1145 = vadd.f32 %v1109, %v1141
    %v1146 = vstv %s111
    %v1147 = vmul.f32 %v188, %v1146
    %v1148 = vmul.f32 %v189, %v1146
    %v1149 = vmul.f32 %v190, %v1146
    %v1150 = vmul.f32 %v191, %v1146
    %v1151 = vstv %s175
    %v1152 = vadd.f32 %v1147, %v1151
    %v1153 = vadd.f32 %v1148, %v1151
    %v1154 = vadd.f32 %v1149, %v1151
    %v1155 = vadd.f32 %v1150, %v1151
    %v1156 = vmin.f32 %v1152, 0.0
    %v1157 = vmin.f32 %v1153, 0.0
    %v1158 = vmin.f32 %v1154, 0.0
    %v1159 = vmin.f32 %v1155, 0.0
    %v1160 = vadd.f32 %v1124, %v1156
    %v1161 = vadd.f32 %v1125, %v1157
    %v1162 = vadd.f32 %v1126, %v1158
    %v1163 = vadd.f32 %v1127, %v1159
    %v1164 = vstv %s112
    %v1165 = vmul.f32 %v188, %v1164
    %v1166 = vmul.f32 %v189, %v1164
    %v1167 = vmul.f32 %v190, %v1164
    %v1168 = vmul.f32 %v191, %v1164
    %v1169 = vstv %s176
    %v1170 = vadd.f32 %v1165, %v1169
    %v1171 = vadd.f32 %v1166, %v1169
    %v1172 = vadd.f32 %v1167, %v1169
    %v1173 = vadd.f32 %v1168, %v1169
    %v1174 = vmin.f32 %v1170, 0.0
    %v1175 = vmin.f32 %v1171, 0.0
    %v1176 = vmin.f32 %v1172, 0.0
    %v1177 = vmin.f32 %v1173, 0.0
    %v1178 = vadd.f32 %v1142, %v1174
    %v1179 = vadd.f32 %v1143, %v1175
    %v1180 = vadd.f32 %v1144, %v1176
    %v1181 = vadd.f32 %v1145, %v1177
    %v1182 = vstv %s113
    %v1183 = vmul.f32 %v188, %v1182
    %v1184 = vmul.f32 %v189, %v1182
    %v1185 = vmul.f32 %v190, %v1182
    %v1186 = vmul.f32 %v191, %v1182
    %v1187 = vstv %s177
    %v1188 = vadd.f32 %v1183, %v1187
    %v1189 = vadd.f32 %v1184, %v1187
    %v1190 = vadd.f32 %v1185, %v1187
    %v1191 = vadd.f32 %v1186, %v1187
    %v1192 = vmin.f32 %v1188, 0.0
    %v1193 = vmin.f32 %v1189, 0.0
    %v1194 = vmin.f32 %v1190, 0.0
    %v1195 = vmin.f32 %v1191, 0.0
    %v1196 = vadd.f32 %v1160, %v1192
    %v1197 = vadd.f32 %v1161, %v1193
    %v1198 = vadd.f32 %v1162, %v1194
    %v1199 = vadd.f32 %v1163, %v1195
    %v1200 = vstv %s114
    %v1201 = vmul.f32 %v188, %v1200
    %v1202 = vmul.f32 %v189, %v1200
    %v1203 = vmul.f32 %v190, %v1200
    %v1204 = vmul.f32 %v191, %v1200
    %v1205 = vstv %s178
    %v1206 = vadd.f32 %v1201, %v1205
    %v1207 = vadd.f32 %v1202, %v1205
    %v1208 = vadd.f32 %v1203, %v1205
    %v1209 = vadd.f32 %v1204, %v1205
    %v1210 = vmin.f32 %v1206, 0.0
    %v1211 = vmin.f32 %v1207, 0.0
    %v1212 = vmin.f32 %v1208, 0.0
    %v1213 = vmin.f32 %v1209, 0.0
    %v1214 = vadd.f32 %v1178, %v1210
    %v1215 = vadd.f32 %v1179, %v1211
    %v1216 = vadd.f32 %v1180, %v1212
    %v1217 = vadd.f32 %v1181, %v1213
    %v1218 = vstv %s115
    %v1219 = vmul.f32 %v188, %v1218
    %v1220 = vmul.f32 %v189, %v1218
    %v1221 = vmul.f32 %v190, %v1218
    %v1222 = vmul.f32 %v191, %v1218
    %v1223 = vstv %s179
    %v1224 = vadd.f32 %v1219, %v1223
    %v1225 = vadd.f32 %v1220, %v1223
    %v1226 = vadd.f32 %v1221, %v1223
    %v1227 = vadd.f32 %v1222, %v1223
    %v1228 = vmin.f32 %v1224, 0.0
    %v1229 = vmin.f32 %v1225, 0.0
    %v1230 = vmin.f32 %v1226, 0.0
    %v1231 = vmin.f32 %v1227, 0.0
    %v1232 = vadd.f32 %v1196, %v1228
    %v1233 = vadd.f32 %v1197, %v1229
    %v1234 = vadd.f32 %v1198, %v1230
    %v1235 = vadd.f32 %v1199, %v1231
    %v1236 = vstv %s116
    %v1237 = vmul.f32 %v188, %v1236
    %v1238 = vmul.f32 %v189, %v1236
    %v1239 = vmul.f32 %v190, %v1236
    %v1240 = vmul.f32 %v191, %v1236
    %v1241 = vstv %s180
    %v1242 = vadd.f32 %v1237, %v1241
    %v1243 = vadd.f32 %v1238, %v1241
    %v1244 = vadd.f32 %v1239, %v1241
    %v1245 = vadd.f32 %v1240, %v1241
    %v1246 = vmin.f32 %v1242, 0.0
    %v1247 = vmin.f32 %v1243, 0.0
    %v1248 = vmin.f32 %v1244, 0.0
    %v1249 = vmin.f32 %v1245, 0.0
    %v1250 = vadd.f32 %v1214, %v1246
    %v1251 = vadd.f32 %v1215, %v1247
    %v1252 = vadd.f32 %v1216, %v1248
    %v1253 = vadd.f32 %v1217, %v1249
    %v1254 = vstv %s117
    %v1255 = vmul.f32 %v188, %v1254
    %v1256 = vmul.f32 %v189, %v1254
    %v1257 = vmul.f32 %v190, %v1254
    %v1258 = vmul.f32 %v191, %v1254
    %v1259 = vstv %s181
    %v1260 = vadd.f32 %v1255, %v1259
    %v1261 = vadd.f32 %v1256, %v1259
    %v1262 = vadd.f32 %v1257, %v1259
    %v1263 = vadd.f32 %v1258, %v1259
    %v1264 = vmin.f32 %v1260, 0.0
    %v1265 = vmin.f32 %v1261, 0.0
    %v1266 = vmin.f32 %v1262, 0.0
    %v1267 = vmin.f32 %v1263, 0.0
    %v1268 = vadd.f32 %v1232, %v1264
    %v1269 = vadd.f32 %v1233, %v1265
    %v1270 = vadd.f32 %v1234, %v1266
    %v1271 = vadd.f32 %v1235, %v1267
    %v1272 = vstv %s118
    %v1273 = vmul.f32 %v188, %v1272
    %v1274 = vmul.f32 %v189, %v1272
    %v1275 = vmul.f32 %v190, %v1272
    %v1276 = vmul.f32 %v191, %v1272
    %v1277 = vstv %s182
    %v1278 = vadd.f32 %v1273, %v1277
    %v1279 = vadd.f32 %v1274, %v1277
    %v1280 = vadd.f32 %v1275, %v1277
    %v1281 = vadd.f32 %v1276, %v1277
    %v1282 = vmin.f32 %v1278, 0.0
    %v1283 = vmin.f32 %v1279, 0.0
    %v1284 = vmin.f32 %v1280, 0.0
    %v1285 = vmin.f32 %v1281, 0.0
    %v1286 = vadd.f32 %v1250, %v1282
    %v1287 = vadd.f32 %v1251, %v1283
    %v1288 = vadd.f32 %v1252, %v1284
    %v1289 = vadd.f32 %v1253, %v1285
    %v1290 = vstv %s119
    %v1291 = vmul.f32 %v188, %v1290
    %v1292 = vmul.f32 %v189, %v1290
    %v1293 = vmul.f32 %v190, %v1290
    %v1294 = vmul.f32 %v191, %v1290
    %v1295 = vstv %s183
    %v1296 = vadd.f32 %v1291, %v1295
    %v1297 = vadd.f32 %v1292, %v1295
    %v1298 = vadd.f32 %v1293, %v1295
    %v1299 = vadd.f32 %v1294, %v1295
    %v1300 = vmin.f32 %v1296, 0.0
    %v1301 = vmin.f32 %v1297, 0.0
    %v1302 = vmin.f32 %v1298, 0.0
    %v1303 = vmin.f32 %v1299, 0.0
    %v1304 = vadd.f32 %v1268, %v1300
    %v1305 = vadd.f32 %v1269, %v1301
    %v1306 = vadd.f32 %v1270, %v1302
    %v1307 = vadd.f32 %v1271, %v1303
    %v1308 = vstv %s120
    %v1309 = vmul.f32 %v188, %v1308
    %v1310 = vmul.f32 %v189, %v1308
    %v1311 = vmul.f32 %v190, %v1308
    %v1312 = vmul.f32 %v191, %v1308
    %v1313 = vstv %s184
    %v1314 = vadd.f32 %v1309, %v1313
    %v1315 = vadd.f32 %v1310, %v1313
    %v1316 = vadd.f32 %v1311, %v1313
    %v1317 = vadd.f32 %v1312, %v1313
    %v1318 = vmin.f32 %v1314, 0.0
    %v1319 = vmin.f32 %v1315, 0.0
    %v1320 = vmin.f32 %v1316, 0.0
    %v1321 = vmin.f32 %v1317, 0.0
    %v1322 = vadd.f32 %v1286, %v1318
    %v1323 = vadd.f32 %v1287, %v1319
    %v1324 = vadd.f32 %v1288, %v1320
    %v1325 = vadd.f32 %v1289, %v1321
    %v1326 = vstv %s121
    %v1327 = vmul.f32 %v188, %v1326
    %v1328 = vmul.f32 %v189, %v1326
    %v1329 = vmul.f32 %v190, %v1326
    %v1330 = vmul.f32 %v191, %v1326
    %v1331 = vstv %s185
    %v1332 = vadd.f32 %v1327, %v1331
    %v1333 = vadd.f32 %v1328, %v1331
    %v1334 = vadd.f32 %v1329, %v1331
    %v1335 = vadd.f32 %v1330, %v1331
    %v1336 = vmin.f32 %v1332, 0.0
    %v1337 = vmin.f32 %v1333, 0.0
    %v1338 = vmin.f32 %v1334, 0.0
    %v1339 = vmin.f32 %v1335, 0.0
    %v1340 = vadd.f32 %v1304, %v1336
    %v1341 = vadd.f32 %v1305, %v1337
    %v1342 = vadd.f32 %v1306, %v1338
    %v1343 = vadd.f32 %v1307, %v1339
    %v1344 = vadd.f32 %v1322, %v1340
    %v1345 = vadd.f32 %v1323, %v1341
    %v1346 = vadd.f32 %v1324, %v1342
    %v1347 = vadd.f32 %v1325, %v1343
    %1348 = vst [vmem:[#allocation10] sm:$0xff] %v1344
    %1349 = vst [vmem:[#allocation10 + $0x8] sm:$0xff] %v1345
    %1350 = vst [vmem:[#allocation10 + $0x10] sm:$0xff] %v1346
    %1351 = vst [vmem:[#allocation10 + $0x18] sm:$0xff] %v1347
    // Predicated region
    $region30: #{tpu_custom_call.1} parent=1 // pred_check
      _
    $region31: #{tpu_custom_call.1} parent=1 // pred_check_branch
      %1353 = sbr.rel (0) target = $region33
    $region32: #{tpu_custom_call.1} parent=1 // pred_region
      %s1355 = ssub.s32 512, 512
      %1356 = vsyncadd [#allocation5], %s1355
      %s1357 = sshll.u32 [#allocation10], 4
      %s1358 = int_to_ptr.vmem [resolvable:$true] %s1357
      %1363 = dma.vmem_to_hbm [thread:$0]  %s1358, 512, %s4, [#allocation5], 128, 128, 8
    $region33: #{tpu_custom_call.1} parent=1 // pred_fallthru
      _
    // Predicated region
    $region34: #{tpu_custom_call.1} parent=1 // pred_check
      _
    $region35: #{tpu_custom_call.1} parent=1 // pred_check_branch
      %1365 = sbr.rel (0) target = $region37
    $region36: #{tpu_custom_call.1} parent=1 // pred_region
      %1366 = dma.done [#allocation5], 512
    $region37: #{tpu_custom_call.1} parent=1 // pred_fallthru
      _
    %1367 = vsyncpa [#allocation4], 1
    %1368 = vsyncpa [#allocation5], 1
    %1369 = vsyncpa [#allocation6], 1
    %1370 = vsyncpa [#allocation9], 1

</llo_original>
